<compile_context>
chip_gen: v7x
topology: tpu7x:2x2x1
jax: 0.10.0
libtpu: 0.0.40
codegen_flags: <defaults>
</compile_context>

<pallas_src>
import jax
import jax.numpy as jnp
from jax.experimental import pallas as pl
from jax.experimental.pallas import tpu as pltpu


def _hswish(z):
    # h_swish(z) = z * relu6(z + 3) / 6
    return z * jnp.clip(z + 3.0, 0.0, 6.0) * (1.0 / 6.0)


def _sigmoid(z):
    # Numerically stable sigmoid (exp only of non-positive arguments).
    e = jnp.exp(-jnp.abs(z))
    r = 1.0 / (1.0 + e)
    return jnp.where(z >= 0, r, e * r)


def _vmem_capacity_bytes():
    try:
        return int(pltpu.get_tpu_info().vmem_capacity_bytes)
    except Exception:
        return 64 * 1024 * 1024       # conservative default (v7x per-TC VMEM)


def _pick_tile(full, row_bytes, budget_bytes, align):
    """Largest divisor of `full` that is a multiple of `align` (the full dim is
    always a legal candidate) whose block fits the budget.  If nothing fits,
    return the SMALLEST legal candidate instead of silently using the full
    dimension."""
    cands = sorted({t for t in range(align, full + 1, align) if full % t == 0}
                   | {full})
    fitting = [t for t in cands if t * row_bytes <= budget_bytes]
    return max(fitting) if fitting else min(cands)


def ca_block(x, params, *, block_budget_bytes=None, donate_x=False):
    N, C, D, H, W = x.shape
    HW = H * W
    MIP = params["w1"].shape[0]
    f32 = jnp.float32
    itemsize = jnp.dtype(x.dtype).itemsize

    # ---- generation-aware VMEM budgets ------------------------------------
    vmem_cap = _vmem_capacity_bytes()            # 128 MiB v5e/v6e, 64 MiB v7x
    vmem_limit = (vmem_cap * 3) // 4             # 96 MiB / 48 MiB scoped limit
    if block_budget_bytes is None:
        budget = max(vmem_limit // 8, 1 << 20)   # per streaming block; 2x in +
        fuse_limit = (vmem_limit * 7) // 10      # 2x out double buffers live
    else:
        budget = block_budget_bytes
        fuse_limit = 4 * block_budget_bytes

    # Fold conv1 bias + eval-mode BatchNorm into the squeeze weights.
    # TODO(synk): BatchNorm3d folded with eval-mode running stats; torch's
    # training-mode batch statistics are not reproduced.
    w1p = (params["bn_scale"] * params["w1"]).astype(f32)                       # (MIP, C)
    b1p = (params["bn_scale"] * params["b1"] + params["bn_shift"]).astype(f32)  # (MIP, 1)

    # One-hot maps between the flattened HW lane axis and the H / W axes.
    lane = jnp.arange(HW)
    eh = (lane[None, :] // W == jnp.arange(H)[:, None]).astype(f32)   # (H, HW)
    ew = (lane[None, :] % W == jnp.arange(W)[:, None]).astype(f32)    # (W, HW)

    # Lane-dense layout: flattened spatial H*W sits on the 128-lane axis.
    # (If HW % 128 != 0 only edge vregs of each store are masked; padding HW in
    #  the wrapper would cost an extra full pass over x, so we don't.)
    x2 = x.reshape(N, C, D, HW)

    x_bytes = N * C * D * HW * itemsize
    slab_bytes = C * D * HW * itemsize
    const_bytes = 4 * ((H + W) * HW + MIP * C + 3 * C * MIP + MIP + 3 * C)

    io_alias = {0: 0} if donate_x else {}
    inv_hw, inv_dw, inv_dh = 1.0 / HW, 1.0 / (D * W), 1.0 / (D * H)

    # ======================================================================
    # Fused single-pass path (~2x |x| HBM traffic): pools + attention + apply
    # ======================================================================
    if 4 * slab_bytes + 2 * const_bytes <= fuse_limit:

        def fused_kernel(x_ref, eh_ref, ew_ref, w1_ref, b1_ref,
                         wd_ref, bd_ref, wh_ref, bh_ref, ww_ref, bw_ref, o_ref):
            xb = x_ref[...]                                        # (C, D, HW)
            # Pools: accumulate in f32 without materializing an f32 copy of xb.
            pd = jnp.sum(xb, axis=2, dtype=f32) * inv_hw           # (C, D)
            s = jnp.sum(xb, axis=1, dtype=f32)                     # (C, HW)
            ehm = eh_ref[...]
            ewm = ew_ref[...]
            ph = jax.lax.dot_general(s, ehm, (((1,), (1,)), ((), ())),
                                     preferred_element_type=f32) * inv_dw
            pw = jax.lax.dot_general(s, ewm, (((1,), (1,)), ((), ())),
                                     preferred_element_type=f32) * inv_dh

            # Squeeze (conv1 + bias + eval-BN folded) as three small matmuls —
            # no non-128-aligned lane concat / column slicing.
            w1 = w1_ref[...]
            b1 = b1_ref[...]
            yd = _hswish(jnp.dot(w1, pd, preferred_element_type=f32) + b1)
            yh = _hswish(jnp.dot(w1, ph, preferred_element_type=f32) + b1)
            yw = _hswish(jnp.dot(w1, pw, preferred_element_type=f32) + b1)

            a_d = _sigmoid(jnp.dot(wd_ref[...], yd, preferred_element_type=f32)
                           + bd_ref[...])                          # (C, D)
            a_h = _sigmoid(jnp.dot(wh_ref[...], yh, preferred_element_type=f32)
                           + bh_ref[...])                          # (C, H)
            a_w = _sigmoid(jnp.dot(ww_ref[...], yw, preferred_element_type=f32)
                           + bw_ref[...])                          # (C, W)

            # Expand a_h / a_w onto the lane axis via the one-hot maps (MXU).
            a_hw = (jnp.dot(a_h, ehm, preferred_element_type=f32) *
                    jnp.dot(a_w, ewm, preferred_element_type=f32))  # (C, HW)

            a_hw = a_hw.astype(xb.dtype)
            a_d = a_d.astype(xb.dtype)
            o_ref[...] = (xb * a_hw[:, None, :]
                          * a_d[:, :, None]).astype(o_ref.dtype)

        def _cf(shape):
            return pl.BlockSpec(shape, lambda n: (0,) * len(shape))

        out2 = pl.pallas_call(
            fused_kernel,
            out_shape=jax.ShapeDtypeStruct((N, C, D, HW), x.dtype),
            grid=(N,),
            in_specs=[
                pl.BlockSpec((None, C, D, HW), lambda n: (n, 0, 0, 0)),
                _cf((H, HW)), _cf((W, HW)),
                _cf((MIP, C)), _cf((MIP, 1)),
                _cf((C, MIP)), _cf((C, 1)),
                _cf((C, MIP)), _cf((C, 1)),
                _cf((C, MIP)), _cf((C, 1)),
            ],
            out_specs=pl.BlockSpec((None, C, D, HW), lambda n: (n, 0, 0, 0)),
            input_output_aliases=io_alias,
            cost_estimate=pl.CostEstimate(
                flops=int(4 * N * C * D * HW),
                transcendentals=int(3 * N * C * (D + H + W)),
                bytes_accessed=int(2 * x_bytes)),
            compiler_params=pltpu.CompilerParams(
                dimension_semantics=("parallel",),
                vmem_limit_bytes=vmem_limit),
        )(x2, eh, ew, w1p, b1p,
          params["wd"], params["bd"], params["wh"], params["bh"],
          params["ww"], params["bw"])
        return out2.reshape(N, C, D, H, W)

    # ======================================================================
    # Fallback path for large shapes: pooling kernel + tiny XLA math + apply
    # ======================================================================
    # --- 1) per-channel pooling: grid (N, C-tiles, D-tiles), D = reduction ---
    tD = _pick_tile(D, C * HW * itemsize, budget, align=8)
    tC = _pick_tile(C, tD * HW * itemsize, budget, align=8)
    nD, nC = D // tD, C // tC

    # Precomputed scatter that places each (tC, tD) D-pool tile into the
    # resident (tC, D) output block (indexed by the D grid axis — no
    # per-iteration iota/one-hot construction inside the kernel).
    scat = (jnp.arange(D)[None, None, :] ==
            (jnp.arange(nD)[:, None, None] * tD +
             jnp.arange(tD)[None, :, None])).astype(f32)            # (nD, tD, D)

    def pool_kernel(x_ref, eh_ref, ew_ref, scat_ref, pd_ref, ph_ref, pw_ref):
        d_idx = pl.program_id(2)
        xb = x_ref[...]                                            # (tC, tD, HW)

        pd_t = jnp.sum(xb, axis=2, dtype=f32) * inv_hw             # (tC, tD)
        # Shared D-sum feeds both the H- and W-pools (lane contraction on MXU).
        s = jnp.sum(xb, axis=1, dtype=f32)                         # (tC, HW)
        ph_t = jax.lax.dot_general(s, eh_ref[...], (((1,), (1,)), ((), ())),
                                   preferred_element_type=f32) * inv_dw
        pw_t = jax.lax.dot_general(s, ew_ref[...], (((1,), (1,)), ((), ())),
                                   preferred_element_type=f32) * inv_dh

        @pl.when(d_idx == 0)
        def _init():
            pd_ref[...] = jnp.zeros_like(pd_ref)
            ph_ref[...] = jnp.zeros_like(ph_ref)
            pw_ref[...] = jnp.zeros_like(pw_ref)

        pd_ref[...] += jnp.dot(pd_t, scat_ref[...],
                               preferred_element_type=f32)         # (tC, D)
        ph_ref[...] += ph_t
        pw_ref[...] += pw_t

    def _cp(shape):
        return pl.BlockSpec(shape, lambda n, c, d: (0,) * len(shape))

    pd, ph, pw = pl.pallas_call(
        pool_kernel,
        out_shape=(jax.ShapeDtypeStruct((N, C, D), f32),
                   jax.ShapeDtypeStruct((N, C, H), f32),
                   jax.ShapeDtypeStruct((N, C, W), f32)),
        grid=(N, nC, nD),
        in_specs=[
            pl.BlockSpec((None, tC, tD, HW), lambda n, c, d: (n, c, d, 0)),
            _cp((H, HW)), _cp((W, HW)),
            pl.BlockSpec((None, tD, D), lambda n, c, d: (d, 0, 0)),
        ],
        out_specs=(
            pl.BlockSpec((None, tC, D), lambda n, c, d: (n, c, 0)),
            pl.BlockSpec((None, tC, H), lambda n, c, d: (n, c, 0)),
            pl.BlockSpec((None, tC, W), lambda n, c, d: (n, c, 0)),
        ),
        cost_estimate=pl.CostEstimate(
            flops=int(2 * N * C * D * HW + N * C * HW * (H + W)),
            transcendentals=0,
            bytes_accessed=int(x_bytes)),
        compiler_params=pltpu.CompilerParams(
            dimension_semantics=("parallel", "parallel", "arbitrary"),
            vmem_limit_bytes=vmem_limit),
    )(x2, eh, ew, scat)

    # --- 2) squeeze / expand / sigmoid: tiny, channel-mixing -> plain XLA ---
    def _attn(p, wexp, bexp):
        y = _hswish(jnp.einsum("mc,ncl->nml", w1p, p) + b1p[None])
        return _sigmoid(jnp.einsum("om,nml->nol", wexp, y) + bexp[None])

    a_d = _attn(pd, params["wd"], params["bd"]).astype(x.dtype)       # (N,C,D)
    a_h = _attn(ph, params["wh"], params["bh"])                       # (N,C,H)
    a_w = _attn(pw, params["ww"], params["bw"])                       # (N,C,W)
    a_hw = (jnp.einsum("nch,hl->ncl", a_h, eh) *
            jnp.einsum("ncw,wl->ncl", a_w, ew)).astype(x.dtype)       # (N,C,HW)

    # --- 3) streaming broadcast-multiply: grid (N, C-tiles, HW-tiles) -------
    tC2 = _pick_tile(C, D * HW * itemsize, budget, align=8)
    tHW = _pick_tile(HW, tC2 * D * itemsize, budget, align=128)
    nC2, nHW = C // tC2, HW // tHW

    def apply_kernel(x_ref, ad_ref, ahw_ref, o_ref):
        xb = x_ref[...]                                          # (tC2, D, tHW)
        o_ref[...] = (xb * ahw_ref[...][:, None, :]
                      * ad_ref[...][:, :, None]).astype(o_ref.dtype)

    out2 = pl.pallas_call(
        apply_kernel,
        out_shape=jax.ShapeDtypeStruct((N, C, D, HW), x.dtype),
        grid=(N, nC2, nHW),
        in_specs=[
            pl.BlockSpec((None, tC2, D, tHW), lambda n, c, s: (n, c, 0, s)),
            pl.BlockSpec((None, tC2, D), lambda n, c, s: (n, c, 0)),
            pl.BlockSpec((None, tC2, tHW), lambda n, c, s: (n, c, s)),
        ],
        out_specs=pl.BlockSpec((None, tC2, D, tHW), lambda n, c, s: (n, c, 0, s)),
        input_output_aliases=io_alias,
        cost_estimate=pl.CostEstimate(
            flops=int(2 * N * C * D * HW),
            transcendentals=0,
            bytes_accessed=int(2 * x_bytes)),
        compiler_params=pltpu.CompilerParams(
            dimension_semantics=("parallel", "parallel", "parallel"),
            vmem_limit_bytes=vmem_limit),
    )(x2, a_d, a_hw)

    return out2.reshape(N, C, D, H, W)


def ca_block_reference(x, params):
    """Pure-JAX reference mirroring the torch forward (eval-mode BN)."""
    N, C, D, H, W = x.shape
    pd = x.mean(axis=(3, 4))                         # (N, C, D)
    ph = x.mean(axis=(2, 4))                         # (N, C, H)
    pw = x.mean(axis=(2, 3))                         # (N, C, W)
    y = jnp.concatenate([pd, ph, pw], axis=2)        # (N, C, D+H+W)

    w1 = params["w1"]
    b1 = params["b1"][:, 0]
    s = params["bn_scale"][:, 0]
    t = params["bn_shift"][:, 0]
    y = jnp.einsum("mc,ncl->nml", w1, y) + b1[None, :, None]
    y = y * s[None, :, None] + t[None, :, None]
    y = _hswish(y)

    yd = y[:, :, :D]
    yh = y[:, :, D:D + H]
    yw = y[:, :, D + H:]

    a_d = _sigmoid(jnp.einsum("om,nml->nol", params["wd"], yd)
                   + params["bd"][None, :, :1])      # (N, C, D)
    a_h = _sigmoid(jnp.einsum("om,nml->nol", params["wh"], yh)
                   + params["bh"][None, :, :1])      # (N, C, H)
    a_w = _sigmoid(jnp.einsum("om,nml->nol", params["ww"], yw)
                   + params["bw"][None, :, :1])      # (N, C, W)

    out = x * a_w[:, :, None, None, :]
    out = out * a_h[:, :, None, :, None]
    out = out * a_d[:, :, :, None, None]
    return out


def make_params(key, inp, oup, reduction=32):
    mip = max(8, inp // reduction)
    ks = jax.random.split(key, 14)
    f = jnp.float32
    w1 = 0.2 * jax.random.normal(ks[0], (mip, inp), f)
    b1 = 0.1 * jax.random.normal(ks[1], (mip, 1), f)
    gamma = 1.0 + 0.1 * jax.random.normal(ks[2], (mip, 1), f)
    beta = 0.05 * jax.random.normal(ks[3], (mip, 1), f)
    rmean = 0.02 * jax.random.normal(ks[4], (mip, 1), f)
    rvar = 1.0 + 0.1 * jax.random.uniform(ks[5], (mip, 1), f)
    eps = 1e-5
    bn_scale = gamma / jnp.sqrt(rvar + eps)
    bn_shift = beta - rmean * bn_scale
    wd = 0.2 * jax.random.normal(ks[6], (oup, mip), f)
    bd = 0.1 * jax.random.normal(ks[7], (oup, 1), f)
    wh = 0.2 * jax.random.normal(ks[8], (oup, mip), f)
    bh = 0.1 * jax.random.normal(ks[9], (oup, 1), f)
    ww = 0.2 * jax.random.normal(ks[10], (oup, mip), f)
    bw = 0.1 * jax.random.normal(ks[11], (oup, 1), f)
    return dict(w1=w1, b1=b1, bn_scale=bn_scale, bn_shift=bn_shift,
                wd=wd, bd=bd, wh=wh, bh=bh, ww=ww, bw=bw)


if __name__ == "__main__":
    key = jax.random.PRNGKey(0)
    kx1, kp1, kx2, kp2 = jax.random.split(key, 4)

    # Case 1: small shape -> fused single-pass kernel (inp == oup required by
    # the final identity * attention multiply; mip = max(8, 16 // 32) = 8).
    N, C, D, H, W = 2, 16, 4, 8, 16
    x1 = jax.random.normal(kx1, (N, C, D, H, W), jnp.float32)
    p1 = make_params(kp1, inp=C, oup=C, reduction=32)
    out1 = jax.block_until_ready(ca_block(x1, p1))
    ref1 = ca_block_reference(x1, p1)
    assert out1.shape == (N, C, D, H, W)
    err1 = float(jnp.max(jnp.abs(out1 - ref1)))
    assert jnp.allclose(out1, ref1, atol=1e-4, rtol=1e-4), err1

    # Case 2: force the tiled fallback path (pool kernel with C/D tiling and
    # D-accumulation, XLA attention math, tiled apply kernel).
    N2, C2, D2, H2, W2 = 1, 32, 16, 8, 16
    x2 = jax.random.normal(kx2, (N2, C2, D2, H2, W2), jnp.float32)
    p2 = make_params(kp2, inp=C2, oup=C2, reduction=32)
    out2 = jax.block_until_ready(
        ca_block(x2, p2, block_budget_bytes=64 * 1024))
    ref2 = ca_block_reference(x2, p2)
    err2 = float(jnp.max(jnp.abs(out2 - ref2)))
    assert jnp.allclose(out2, ref2, atol=1e-4, rtol=1e-4), err2

    print("KERNEL_OK")
</pallas_src>

<mosaic_0001>
module attributes {stable_mosaic.version = 11 : i64} {
  func.func @fused_kernel(%arg0: i32, %arg1: memref<1x16x4x128xf32, #tpu.memory_space<vmem>>, %arg2: memref<8x128xf32, #tpu.memory_space<vmem>>, %arg3: memref<16x128xf32, #tpu.memory_space<vmem>>, %arg4: memref<8x16xf32, #tpu.memory_space<vmem>>, %arg5: memref<8x1xf32, #tpu.memory_space<vmem>>, %arg6: memref<16x8xf32, #tpu.memory_space<vmem>>, %arg7: memref<16x1xf32, #tpu.memory_space<vmem>>, %arg8: memref<16x8xf32, #tpu.memory_space<vmem>>, %arg9: memref<16x1xf32, #tpu.memory_space<vmem>>, %arg10: memref<16x8xf32, #tpu.memory_space<vmem>>, %arg11: memref<16x1xf32, #tpu.memory_space<vmem>>, %arg12: memref<1x16x4x128xf32, #tpu.memory_space<vmem>>) attributes {dimension_semantics = [#tpu.dimension_semantics<parallel>], iteration_bounds = array<i64: 2>, scalar_prefetch = 0 : i64, scratch_operands = 0 : i64, tpu.core_type = #tpu.core_type<tc>, window_params = [{transform_indices = @transform_0, window_bounds = array<i64: 1, 16, 4, 128>}, {pipeline_mode = #tpu.pipeline_mode<synchronous>, transform_indices = @transform_1, window_bounds = array<i64: 8, 128>}, {pipeline_mode = #tpu.pipeline_mode<synchronous>, transform_indices = @transform_2, window_bounds = array<i64: 16, 128>}, {pipeline_mode = #tpu.pipeline_mode<synchronous>, transform_indices = @transform_3, window_bounds = array<i64: 8, 16>}, {pipeline_mode = #tpu.pipeline_mode<synchronous>, transform_indices = @transform_4, window_bounds = array<i64: 8, 1>}, {pipeline_mode = #tpu.pipeline_mode<synchronous>, transform_indices = @transform_5, window_bounds = array<i64: 16, 8>}, {pipeline_mode = #tpu.pipeline_mode<synchronous>, transform_indices = @transform_6, window_bounds = array<i64: 16, 1>}, {pipeline_mode = #tpu.pipeline_mode<synchronous>, transform_indices = @transform_7, window_bounds = array<i64: 16, 8>}, {pipeline_mode = #tpu.pipeline_mode<synchronous>, transform_indices = @transform_8, window_bounds = array<i64: 16, 1>}, {pipeline_mode = #tpu.pipeline_mode<synchronous>, transform_indices = @transform_9, window_bounds = array<i64: 16, 8>}, {pipeline_mode = #tpu.pipeline_mode<synchronous>, transform_indices = @transform_10, window_bounds = array<i64: 16, 1>}, {transform_indices = @transform_11, window_bounds = array<i64: 1, 16, 4, 128>}]} {
    %c0 = arith.constant 0 : index
    %c0_0 = arith.constant 0 : index
    %c0_1 = arith.constant 0 : index
    %c0_2 = arith.constant 0 : index
    %0 = vector.load %arg1[%c0, %c0_0, %c0_1, %c0_2] : memref<1x16x4x128xf32, #tpu.memory_space<vmem>>, vector<1x16x4x128xf32>
    %1 = vector.shape_cast %0 : vector<1x16x4x128xf32> to vector<16x4x128xf32>
    %cst = arith.constant dense<0.000000e+00> : vector<16x4xf32>
    %2 = vector.multi_reduction <add>, %1, %cst [2] : vector<16x4x128xf32> to vector<16x4xf32>
    %cst_3 = arith.constant 7.812500e-03 : f32
    %3 = vector.broadcast %cst_3 : f32 to vector<16x4xf32>
    %4 = arith.mulf %2, %3 : vector<16x4xf32>
    %cst_4 = arith.constant dense<0.000000e+00> : vector<16x128xf32>
    %5 = vector.multi_reduction <add>, %1, %cst_4 [1] : vector<16x4x128xf32> to vector<16x128xf32>
    %c0_5 = arith.constant 0 : index
    %c0_6 = arith.constant 0 : index
    %6 = vector.load %arg2[%c0_5, %c0_6] : memref<8x128xf32, #tpu.memory_space<vmem>>, vector<8x128xf32>
    %c0_7 = arith.constant 0 : index
    %c0_8 = arith.constant 0 : index
    %7 = vector.load %arg3[%c0_7, %c0_8] : memref<16x128xf32, #tpu.memory_space<vmem>>, vector<16x128xf32>
    %cst_9 = arith.constant dense<0.000000e+00> : vector<16x8xf32>
    %8 = tpu.matmul %5, %6, %cst_9 {dimension_numbers = #tpu.dot_dimension_numbers<[1], [1], [0], [0], [0, 0, 1, 0], [], []>} : vector<16x128xf32>, vector<8x128xf32>, vector<16x8xf32> -> vector<16x8xf32>
    %cst_10 = arith.constant 1.562500e-02 : f32
    %9 = vector.broadcast %cst_10 : f32 to vector<16x8xf32>
    %10 = arith.mulf %8, %9 : vector<16x8xf32>
    %cst_11 = arith.constant dense<0.000000e+00> : vector<16x16xf32>
    %11 = tpu.matmul %5, %7, %cst_11 {dimension_numbers = #tpu.dot_dimension_numbers<[1], [1], [0], [0], [0, 0, 1, 0], [], []>} : vector<16x128xf32>, vector<16x128xf32>, vector<16x16xf32> -> vector<16x16xf32>
    %cst_12 = arith.constant 3.125000e-02 : f32
    %12 = vector.broadcast %cst_12 : f32 to vector<16x16xf32>
    %13 = arith.mulf %11, %12 : vector<16x16xf32>
    %c0_13 = arith.constant 0 : index
    %c0_14 = arith.constant 0 : index
    %14 = vector.load %arg4[%c0_13, %c0_14] : memref<8x16xf32, #tpu.memory_space<vmem>>, vector<8x16xf32>
    %c0_15 = arith.constant 0 : index
    %c0_16 = arith.constant 0 : index
    %15 = vector.load %arg5[%c0_15, %c0_16] : memref<8x1xf32, #tpu.memory_space<vmem>>, vector<8x1xf32>
    %cst_17 = arith.constant dense<0.000000e+00> : vector<8x4xf32>
    %16 = tpu.matmul %14, %4, %cst_17 {dimension_numbers = #tpu.dot_dimension_numbers<[1], [0], [0], [1], [0, 0, 1, 1], [], []>} : vector<8x16xf32>, vector<16x4xf32>, vector<8x4xf32> -> vector<8x4xf32>
    %17 = vector.broadcast %15 : vector<8x1xf32> to vector<8x4xf32>
    %18 = arith.addf %16, %17 : vector<8x4xf32>
    %cst_18 = arith.constant 3.000000e+00 : f32
    %19 = vector.broadcast %cst_18 : f32 to vector<8x4xf32>
    %20 = arith.addf %18, %19 : vector<8x4xf32>
    %cst_19 = arith.constant 0.000000e+00 : f32
    %cst_20 = arith.constant 6.000000e+00 : f32
    %21 = vector.broadcast %cst_19 : f32 to vector<8x4xf32>
    %22 = arith.maximumf %21, %20 : vector<8x4xf32>
    %23 = vector.broadcast %cst_20 : f32 to vector<8x4xf32>
    %24 = arith.minimumf %23, %22 : vector<8x4xf32>
    %25 = arith.mulf %18, %24 : vector<8x4xf32>
    %cst_21 = arith.constant 0.166666672 : f32
    %26 = vector.broadcast %cst_21 : f32 to vector<8x4xf32>
    %27 = arith.mulf %25, %26 : vector<8x4xf32>
    %cst_22 = arith.constant dense<0.000000e+00> : vector<8x8xf32>
    %28 = tpu.matmul %14, %10, %cst_22 {dimension_numbers = #tpu.dot_dimension_numbers<[1], [0], [0], [1], [0, 0, 1, 1], [], []>} : vector<8x16xf32>, vector<16x8xf32>, vector<8x8xf32> -> vector<8x8xf32>
    %29 = vector.broadcast %15 : vector<8x1xf32> to vector<8x8xf32>
    %30 = arith.addf %28, %29 : vector<8x8xf32>
    %cst_23 = arith.constant 3.000000e+00 : f32
    %31 = vector.broadcast %cst_23 : f32 to vector<8x8xf32>
    %32 = arith.addf %30, %31 : vector<8x8xf32>
    %cst_24 = arith.constant 0.000000e+00 : f32
    %cst_25 = arith.constant 6.000000e+00 : f32
    %33 = vector.broadcast %cst_24 : f32 to vector<8x8xf32>
    %34 = arith.maximumf %33, %32 : vector<8x8xf32>
    %35 = vector.broadcast %cst_25 : f32 to vector<8x8xf32>
    %36 = arith.minimumf %35, %34 : vector<8x8xf32>
    %37 = arith.mulf %30, %36 : vector<8x8xf32>
    %cst_26 = arith.constant 0.166666672 : f32
    %38 = vector.broadcast %cst_26 : f32 to vector<8x8xf32>
    %39 = arith.mulf %37, %38 : vector<8x8xf32>
    %cst_27 = arith.constant dense<0.000000e+00> : vector<8x16xf32>
    %40 = tpu.matmul %14, %13, %cst_27 {dimension_numbers = #tpu.dot_dimension_numbers<[1], [0], [0], [1], [0, 0, 1, 1], [], []>} : vector<8x16xf32>, vector<16x16xf32>, vector<8x16xf32> -> vector<8x16xf32>
    %41 = vector.broadcast %15 : vector<8x1xf32> to vector<8x16xf32>
    %42 = arith.addf %40, %41 : vector<8x16xf32>
    %cst_28 = arith.constant 3.000000e+00 : f32
    %43 = vector.broadcast %cst_28 : f32 to vector<8x16xf32>
    %44 = arith.addf %42, %43 : vector<8x16xf32>
    %cst_29 = arith.constant 0.000000e+00 : f32
    %cst_30 = arith.constant 6.000000e+00 : f32
    %45 = vector.broadcast %cst_29 : f32 to vector<8x16xf32>
    %46 = arith.maximumf %45, %44 : vector<8x16xf32>
    %47 = vector.broadcast %cst_30 : f32 to vector<8x16xf32>
    %48 = arith.minimumf %47, %46 : vector<8x16xf32>
    %49 = arith.mulf %42, %48 : vector<8x16xf32>
    %cst_31 = arith.constant 0.166666672 : f32
    %50 = vector.broadcast %cst_31 : f32 to vector<8x16xf32>
    %51 = arith.mulf %49, %50 : vector<8x16xf32>
    %c0_32 = arith.constant 0 : index
    %c0_33 = arith.constant 0 : index
    %52 = vector.load %arg6[%c0_32, %c0_33] : memref<16x8xf32, #tpu.memory_space<vmem>>, vector<16x8xf32>
    %cst_34 = arith.constant dense<0.000000e+00> : vector<16x4xf32>
    %53 = tpu.matmul %52, %27, %cst_34 {dimension_numbers = #tpu.dot_dimension_numbers<[1], [0], [0], [1], [0, 0, 1, 1], [], []>} : vector<16x8xf32>, vector<8x4xf32>, vector<16x4xf32> -> vector<16x4xf32>
    %c0_35 = arith.constant 0 : index
    %c0_36 = arith.constant 0 : index
    %54 = vector.load %arg7[%c0_35, %c0_36] : memref<16x1xf32, #tpu.memory_space<vmem>>, vector<16x1xf32>
    %55 = vector.broadcast %54 : vector<16x1xf32> to vector<16x4xf32>
    %56 = arith.addf %53, %55 : vector<16x4xf32>
    %57 = math.absf %56 : vector<16x4xf32>
    %cst_37 = arith.constant 0.000000e+00 : f32
    %58 = vector.broadcast %cst_37 : f32 to vector<16x4xf32>
    %59 = arith.subf %58, %57 : vector<16x4xf32>
    %60 = math.exp %59 : vector<16x4xf32>
    %cst_38 = arith.constant 1.000000e+00 : f32
    %61 = vector.broadcast %cst_38 : f32 to vector<16x4xf32>
    %62 = arith.addf %61, %60 : vector<16x4xf32>
    %cst_39 = arith.constant 1.000000e+00 : f32
    %63 = vector.broadcast %cst_39 : f32 to vector<16x4xf32>
    %64 = arith.divf %63, %62 : vector<16x4xf32>
    %cst_40 = arith.constant 0.000000e+00 : f32
    %65 = vector.broadcast %cst_40 : f32 to vector<16x4xf32>
    %66 = arith.cmpf oge, %56, %65 : vector<16x4xf32>
    %67 = arith.mulf %60, %64 : vector<16x4xf32>
    %68 = arith.select %66, %64, %67 : vector<16x4xi1>, vector<16x4xf32>
    %c0_41 = arith.constant 0 : index
    %c0_42 = arith.constant 0 : index
    %69 = vector.load %arg8[%c0_41, %c0_42] : memref<16x8xf32, #tpu.memory_space<vmem>>, vector<16x8xf32>
    %cst_43 = arith.constant dense<0.000000e+00> : vector<16x8xf32>
    %70 = tpu.matmul %69, %39, %cst_43 {dimension_numbers = #tpu.dot_dimension_numbers<[1], [0], [0], [1], [0, 0, 1, 1], [], []>} : vector<16x8xf32>, vector<8x8xf32>, vector<16x8xf32> -> vector<16x8xf32>
    %c0_44 = arith.constant 0 : index
    %c0_45 = arith.constant 0 : index
    %71 = vector.load %arg9[%c0_44, %c0_45] : memref<16x1xf32, #tpu.memory_space<vmem>>, vector<16x1xf32>
    %72 = vector.broadcast %71 : vector<16x1xf32> to vector<16x8xf32>
    %73 = arith.addf %70, %72 : vector<16x8xf32>
    %74 = math.absf %73 : vector<16x8xf32>
    %cst_46 = arith.constant 0.000000e+00 : f32
    %75 = vector.broadcast %cst_46 : f32 to vector<16x8xf32>
    %76 = arith.subf %75, %74 : vector<16x8xf32>
    %77 = math.exp %76 : vector<16x8xf32>
    %cst_47 = arith.constant 1.000000e+00 : f32
    %78 = vector.broadcast %cst_47 : f32 to vector<16x8xf32>
    %79 = arith.addf %78, %77 : vector<16x8xf32>
    %cst_48 = arith.constant 1.000000e+00 : f32
    %80 = vector.broadcast %cst_48 : f32 to vector<16x8xf32>
    %81 = arith.divf %80, %79 : vector<16x8xf32>
    %cst_49 = arith.constant 0.000000e+00 : f32
    %82 = vector.broadcast %cst_49 : f32 to vector<16x8xf32>
    %83 = arith.cmpf oge, %73, %82 : vector<16x8xf32>
    %84 = arith.mulf %77, %81 : vector<16x8xf32>
    %85 = arith.select %83, %81, %84 : vector<16x8xi1>, vector<16x8xf32>
    %c0_50 = arith.constant 0 : index
    %c0_51 = arith.constant 0 : index
    %86 = vector.load %arg10[%c0_50, %c0_51] : memref<16x8xf32, #tpu.memory_space<vmem>>, vector<16x8xf32>
    %cst_52 = arith.constant dense<0.000000e+00> : vector<16x16xf32>
    %87 = tpu.matmul %86, %51, %cst_52 {dimension_numbers = #tpu.dot_dimension_numbers<[1], [0], [0], [1], [0, 0, 1, 1], [], []>} : vector<16x8xf32>, vector<8x16xf32>, vector<16x16xf32> -> vector<16x16xf32>
    %c0_53 = arith.constant 0 : index
    %c0_54 = arith.constant 0 : index
    %88 = vector.load %arg11[%c0_53, %c0_54] : memref<16x1xf32, #tpu.memory_space<vmem>>, vector<16x1xf32>
    %89 = vector.broadcast %88 : vector<16x1xf32> to vector<16x16xf32>
    %90 = arith.addf %87, %89 : vector<16x16xf32>
    %91 = math.absf %90 : vector<16x16xf32>
    %cst_55 = arith.constant 0.000000e+00 : f32
    %92 = vector.broadcast %cst_55 : f32 to vector<16x16xf32>
    %93 = arith.subf %92, %91 : vector<16x16xf32>
    %94 = math.exp %93 : vector<16x16xf32>
    %cst_56 = arith.constant 1.000000e+00 : f32
    %95 = vector.broadcast %cst_56 : f32 to vector<16x16xf32>
    %96 = arith.addf %95, %94 : vector<16x16xf32>
    %cst_57 = arith.constant 1.000000e+00 : f32
    %97 = vector.broadcast %cst_57 : f32 to vector<16x16xf32>
    %98 = arith.divf %97, %96 : vector<16x16xf32>
    %cst_58 = arith.constant 0.000000e+00 : f32
    %99 = vector.broadcast %cst_58 : f32 to vector<16x16xf32>
    %100 = arith.cmpf oge, %90, %99 : vector<16x16xf32>
    %101 = arith.mulf %94, %98 : vector<16x16xf32>
    %102 = arith.select %100, %98, %101 : vector<16x16xi1>, vector<16x16xf32>
    %cst_59 = arith.constant dense<0.000000e+00> : vector<16x128xf32>
    %103 = tpu.matmul %85, %6, %cst_59 {dimension_numbers = #tpu.dot_dimension_numbers<[1], [0], [0], [1], [0, 0, 1, 1], [], []>} : vector<16x8xf32>, vector<8x128xf32>, vector<16x128xf32> -> vector<16x128xf32>
    %cst_60 = arith.constant dense<0.000000e+00> : vector<16x128xf32>
    %104 = tpu.matmul %102, %7, %cst_60 {dimension_numbers = #tpu.dot_dimension_numbers<[1], [0], [0], [1], [0, 0, 1, 1], [], []>} : vector<16x16xf32>, vector<16x128xf32>, vector<16x128xf32> -> vector<16x128xf32>
    %105 = arith.mulf %103, %104 : vector<16x128xf32>
    %106 = vector.shape_cast %105 : vector<16x128xf32> to vector<16x1x128xf32>
    %107 = vector.broadcast %106 : vector<16x1x128xf32> to vector<16x4x128xf32>
    %108 = arith.mulf %1, %107 : vector<16x4x128xf32>
    %109 = vector.shape_cast %68 : vector<16x4xf32> to vector<16x4x1xf32>
    %110 = vector.broadcast %109 : vector<16x4x1xf32> to vector<16x4x128xf32>
    %111 = arith.mulf %108, %110 : vector<16x4x128xf32>
    %c0_61 = arith.constant 0 : index
    %c0_62 = arith.constant 0 : index
    %c0_63 = arith.constant 0 : index
    %c0_64 = arith.constant 0 : index
    %112 = vector.load %arg12[%c0_61, %c0_62, %c0_63, %c0_64] : memref<1x16x4x128xf32, #tpu.memory_space<vmem>>, vector<1x16x4x128xf32>
    %113 = vector.shape_cast %112 : vector<1x16x4x128xf32> to vector<16x4x128xf32>
    %114 = vector.shape_cast %111 : vector<16x4x128xf32> to vector<1x16x4x128xf32>
    tpu.vector_store %arg12[%c0_61, %c0_62, %c0_63, %c0_64], %114 {strides = array<i32>} : memref<1x16x4x128xf32, #tpu.memory_space<vmem>>, vector<1x16x4x128xf32>,
    return
  }
  func.func @transform_0(%arg0: i32) -> (i32, i32, i32, i32) {
    %c0_i32 = arith.constant 0 : i32
    %c0_i32_0 = arith.constant 0 : i32
    %c0_i32_1 = arith.constant 0 : i32
    %c0_i32_2 = arith.constant 0 : i32
    return %arg0, %c0_i32, %c0_i32_0, %c0_i32_1 : i32, i32, i32, i32
  }
  func.func @transform_1(%arg0: i32) -> (i32, i32) {
    %c0_i32 = arith.constant 0 : i32
    %c0_i32_0 = arith.constant 0 : i32
    %c0_i32_1 = arith.constant 0 : i32
    return %c0_i32, %c0_i32_0 : i32, i32
  }
  func.func @transform_2(%arg0: i32) -> (i32, i32) {
    %c0_i32 = arith.constant 0 : i32
    %c0_i32_0 = arith.constant 0 : i32
    %c0_i32_1 = arith.constant 0 : i32
    return %c0_i32, %c0_i32_0 : i32, i32
  }
  func.func @transform_3(%arg0: i32) -> (i32, i32) {
    %c0_i32 = arith.constant 0 : i32
    %c0_i32_0 = arith.constant 0 : i32
    %c0_i32_1 = arith.constant 0 : i32
    return %c0_i32, %c0_i32_0 : i32, i32
  }
  func.func @transform_4(%arg0: i32) -> (i32, i32) {
    %c0_i32 = arith.constant 0 : i32
    %c0_i32_0 = arith.constant 0 : i32
    %c0_i32_1 = arith.constant 0 : i32
    return %c0_i32, %c0_i32_0 : i32, i32
  }
  func.func @transform_5(%arg0: i32) -> (i32, i32) {
    %c0_i32 = arith.constant 0 : i32
    %c0_i32_0 = arith.constant 0 : i32
    %c0_i32_1 = arith.constant 0 : i32
    return %c0_i32, %c0_i32_0 : i32, i32
  }
  func.func @transform_6(%arg0: i32) -> (i32, i32) {
    %c0_i32 = arith.constant 0 : i32
    %c0_i32_0 = arith.constant 0 : i32
    %c0_i32_1 = arith.constant 0 : i32
    return %c0_i32, %c0_i32_0 : i32, i32
  }
  func.func @transform_7(%arg0: i32) -> (i32, i32) {
    %c0_i32 = arith.constant 0 : i32
    %c0_i32_0 = arith.constant 0 : i32
    %c0_i32_1 = arith.constant 0 : i32
    return %c0_i32, %c0_i32_0 : i32, i32
  }
  func.func @transform_8(%arg0: i32) -> (i32, i32) {
    %c0_i32 = arith.constant 0 : i32
    %c0_i32_0 = arith.constant 0 : i32
    %c0_i32_1 = arith.constant 0 : i32
    return %c0_i32, %c0_i32_0 : i32, i32
  }
  func.func @transform_9(%arg0: i32) -> (i32, i32) {
    %c0_i32 = arith.constant 0 : i32
    %c0_i32_0 = arith.constant 0 : i32
    %c0_i32_1 = arith.constant 0 : i32
    return %c0_i32, %c0_i32_0 : i32, i32
  }
  func.func @transform_10(%arg0: i32) -> (i32, i32) {
    %c0_i32 = arith.constant 0 : i32
    %c0_i32_0 = arith.constant 0 : i32
    %c0_i32_1 = arith.constant 0 : i32
    return %c0_i32, %c0_i32_0 : i32, i32
  }
  func.func @transform_11(%arg0: i32) -> (i32, i32, i32, i32) {
    %c0_i32 = arith.constant 0 : i32
    %c0_i32_0 = arith.constant 0 : i32
    %c0_i32_1 = arith.constant 0 : i32
    %c0_i32_2 = arith.constant 0 : i32
    return %arg0, %c0_i32, %c0_i32_0, %c0_i32_1 : i32, i32, i32, i32
  }
}

</mosaic_0001>

<llo_original>
// kernel: tpu_custom_call.1
$region0: #{tpu_custom_call.1}
  #allocation0 [shape = 'u32[]', space=smem, size = 0x4, offset = 0x4, fixed_abs, tag = 'smem constant byte address 0x4 - core index']
  #allocation1 [shape = 'u32[144,128]{1,0:T(1,128)}', space=vmem, size = 0x12000, scoped, tag = 'internal scratch']
  %s0 = inlined_call_operand.vmem [shape: f32[2,16,4,128], index: 0, kind: input, shape index: {}]
  %s1 = inlined_call_operand.hbm [shape: f32[8,128], index: 1, kind: input, shape index: {}]
  %s2 = inlined_call_operand.hbm [shape: f32[16,128], index: 2, kind: input, shape index: {}]
  %s3 = inlined_call_operand.hbm [shape: f32[8,16], index: 3, kind: input, shape index: {}]
  %s4 = inlined_call_operand.vmem [shape: f32[8,1], index: 4, kind: input, shape index: {}]
  %s5 = inlined_call_operand.vmem [shape: f32[16,8], index: 5, kind: input, shape index: {}]
  %s6 = inlined_call_operand.vmem [shape: f32[16,1], index: 6, kind: input, shape index: {}]
  %s7 = inlined_call_operand.vmem [shape: f32[16,8], index: 7, kind: input, shape index: {}]
  %s8 = inlined_call_operand.vmem [shape: f32[16,1], index: 8, kind: input, shape index: {}]
  %s9 = inlined_call_operand.vmem [shape: f32[16,8], index: 9, kind: input, shape index: {}]
  %s10 = inlined_call_operand.vmem [shape: f32[16,1], index: 10, kind: input, shape index: {}]
  %s11 = inlined_call_operand.hbm [shape: f32[2,16,4,128], index: 11, kind: output, shape index: {}]
  %s12 = sld [smem:[#allocation0]]
  $region89: #{tpu_custom_call.1} parent=0
    _
  %s14 = ssub.s32 1, %s12
  %s15 = scalar_select 0, %s14, %s12
  $region1: #{tpu_custom_call.1} parent=0
    #allocation2 [shape = 'u8[4096]{0}', space=vmem, size = 0x1000, scoped, tag = 'input window, operand 1, single buffered']
    #allocation3 [shape = 's32[2]{0}', space=sflag, size = 0x8, scoped, tag = 'scoped memory for tpu_custom_call.1']
    #allocation4 [shape = 's32[2]{0}', space=sflag, size = 0x8, scoped, tag = 'scoped memory for tpu_custom_call.1']
    #allocation5 [shape = 'u8[8192]{0}', space=vmem, size = 0x2000, scoped, tag = 'input window, operand 2, single buffered']
    #allocation6 [shape = 's32[1]{0}', space=sflag, size = 0x4, scoped, tag = 'scoped memory for tpu_custom_call.1']
    #allocation7 [shape = 'u8[4096]{0}', space=vmem, size = 0x1000, scoped, tag = 'input window, operand 3, single buffered']
    #allocation8 [shape = 'u8[65536]{0}', space=vmem, size = 0x10000, scoped, tag = 'output window, operand 0']
    %16 = vsyncpa [#allocation3], 0
    %17 = vsyncpa [#allocation6], 0
    %18 = vsyncpa [#allocation4], 0
    %s19 = scalar_lea.sflag [#allocation4], 1
    %20 = vsyncpa %s19, 0
    loop: start=0, step=1, limit=4
    $region2: #{tpu_custom_call.1} parent=1 // loop_pre_header
      _
    $region3: #{tpu_custom_call.1} parent=1 // loop_header
      %s22 = sphi 0, %s26
      %p23 = scmp.ge.s32.totalorder %s22, 4
      %s32 = sphi 0, %s34
      %s35 = sphi 0, %s32
      %s36 = sphi 0, %s35
      %s52 = sphi 0, %s36
      %s56 = sphi 0, %s56
      %s58 = sphi 0, %s56
      %s59 = sphi 0, %s58
      %s73 = sphi 0, %s59
      %s77 = sphi 0, %s77
      %s79 = sphi 0, %s77
      %s80 = sphi 0, %s79
      %s94 = sphi 0, %s80
      %s98 = sphi 0, %s98
      %s100 = sphi 0, %s98
      %s101 = sphi 0, %s100
      %s115 = sphi 0, %s101
      %s119 = sphi 0, %s119
      %s121 = sphi 0, %s119
      %s122 = sphi 0, %s121
      %s136 = sphi 0, %s122
      %s140 = sphi 0, %s140
      %s142 = sphi 0, %s140
      %s143 = sphi 0, %s142
      %s157 = sphi 0, %s143
      %s161 = sphi 0, %s161
      %s163 = sphi 0, %s161
      %s164 = sphi 0, %s163
      %s178 = sphi 0, %s164
      %s182 = sphi 0, %s182
      %s184 = sphi 0, %s182
      %s185 = sphi 0, %s184
      %s199 = sphi 0, %s185
      %s203 = sphi 0, %s203
      %s205 = sphi 0, %s203
      %s206 = sphi 0, %s205
      %s220 = sphi 0, %s206
      %s224 = sphi 0, %s224
      %s226 = sphi 0, %s224
      %s227 = sphi 0, %s226
      %s241 = sphi 0, %s227
      %s245 = sphi 0, %s245
      %s247 = sphi 0, %s245
      %s248 = sphi 0, %s247
      %s262 = sphi 0, %s248
      %s268 = sphi 0, %s270
      %s271 = sphi 0, %s268
      %s272 = sphi 0, %s271
      %s288 = sphi 0, %s272
    $region4: #{tpu_custom_call.1} parent=1 // loop_header_branch
      %25 = sbr.rel (%p23) target = $region8
    $region5: #{tpu_custom_call.1} parent=1 // loop_body
      %s27 = ssub.s32 %s22, 1
      %s28 = ssub.s32 %s22, 2
      %s29 = sadd.s32 %s22, 1
      %s30 = ssub.s32 %s22, %s29
      %p31 = scmp.eq.s32.totalorder %s30, 0
      %s33 = sadd.s32 %s32, 1
      %s34 = scalar_select %p31, %s32, %s33
      %p37 = pneg %p31
      %p38 = scmp.eq.s32.totalorder %s22, 1
      %p39 = por %p37, %p38
      %p40 = scmp.ne.s32.totalorder %s32, %s35
      %p41 = scmp.eq.s32.totalorder %s22, 0
      %p42 = por %p40, %p41
      %p43 = scmp.ne.s32.totalorder %s32, %s35
      %p44 = scmp.eq.s32.totalorder %s27, 1
      %p45 = por %p43, %p44
      %p46 = scmp.ne.s32.totalorder %s35, %s36
      %p47 = scmp.eq.s32.totalorder %s27, 0
      %p48 = por %p46, %p47
      %p49 = scmp.ne.s32.totalorder %s35, %s36
      %p50 = scmp.eq.s32.totalorder %s28, 1
      %p51 = por %p49, %p50
      %p53 = scmp.ne.s32.totalorder %s36, %s52
      %p54 = scmp.eq.s32.totalorder %s28, 0
      %p55 = por %p53, %p54
      %s57 = sadd.s32 %s56, 1
      %p60 = scmp.eq.s32.totalorder %s22, 1
      %p61 = scmp.ne.s32.totalorder %s56, %s58
      %p62 = scmp.eq.s32.totalorder %s22, 0
      %p63 = por %p61, %p62
      %p64 = scmp.ne.s32.totalorder %s56, %s58
      %p65 = scmp.eq.s32.totalorder %s27, 1
      %p66 = por %p64, %p65
      %p67 = scmp.ne.s32.totalorder %s58, %s59
      %p68 = scmp.eq.s32.totalorder %s27, 0
      %p69 = por %p67, %p68
      %p70 = scmp.ne.s32.totalorder %s58, %s59
      %p71 = scmp.eq.s32.totalorder %s28, 1
      %p72 = por %p70, %p71
      %p74 = scmp.ne.s32.totalorder %s59, %s73
      %p75 = scmp.eq.s32.totalorder %s28, 0
      %p76 = por %p74, %p75
      %s78 = sadd.s32 %s77, 1
      %p81 = scmp.eq.s32.totalorder %s22, 1
      %p82 = scmp.ne.s32.totalorder %s77, %s79
      %p83 = scmp.eq.s32.totalorder %s22, 0
      %p84 = por %p82, %p83
      %p85 = scmp.ne.s32.totalorder %s77, %s79
      %p86 = scmp.eq.s32.totalorder %s27, 1
      %p87 = por %p85, %p86
      %p88 = scmp.ne.s32.totalorder %s79, %s80
      %p89 = scmp.eq.s32.totalorder %s27, 0
      %p90 = por %p88, %p89
      %p91 = scmp.ne.s32.totalorder %s79, %s80
      %p92 = scmp.eq.s32.totalorder %s28, 1
      %p93 = por %p91, %p92
      %p95 = scmp.ne.s32.totalorder %s80, %s94
      %p96 = scmp.eq.s32.totalorder %s28, 0
      %p97 = por %p95, %p96
      %s99 = sadd.s32 %s98, 1
      %p102 = scmp.eq.s32.totalorder %s22, 1
      %p103 = scmp.ne.s32.totalorder %s98, %s100
      %p104 = scmp.eq.s32.totalorder %s22, 0
      %p105 = por %p103, %p104
      %p106 = scmp.ne.s32.totalorder %s98, %s100
      %p107 = scmp.eq.s32.totalorder %s27, 1
      %p108 = por %p106, %p107
      %p109 = scmp.ne.s32.totalorder %s100, %s101
      %p110 = scmp.eq.s32.totalorder %s27, 0
      %p111 = por %p109, %p110
      %p112 = scmp.ne.s32.totalorder %s100, %s101
      %p113 = scmp.eq.s32.totalorder %s28, 1
      %p114 = por %p112, %p113
      %p116 = scmp.ne.s32.totalorder %s101, %s115
      %p117 = scmp.eq.s32.totalorder %s28, 0
      %p118 = por %p116, %p117
      %s120 = sadd.s32 %s119, 1
      %p123 = scmp.eq.s32.totalorder %s22, 1
      %p124 = scmp.ne.s32.totalorder %s119, %s121
      %p125 = scmp.eq.s32.totalorder %s22, 0
      %p126 = por %p124, %p125
      %p127 = scmp.ne.s32.totalorder %s119, %s121
      %p128 = scmp.eq.s32.totalorder %s27, 1
      %p129 = por %p127, %p128
      %p130 = scmp.ne.s32.totalorder %s121, %s122
      %p131 = scmp.eq.s32.totalorder %s27, 0
      %p132 = por %p130, %p131
      %p133 = scmp.ne.s32.totalorder %s121, %s122
      %p134 = scmp.eq.s32.totalorder %s28, 1
      %p135 = por %p133, %p134
      %p137 = scmp.ne.s32.totalorder %s122, %s136
      %p138 = scmp.eq.s32.totalorder %s28, 0
      %p139 = por %p137, %p138
      %s141 = sadd.s32 %s140, 1
      %p144 = scmp.eq.s32.totalorder %s22, 1
      %p145 = scmp.ne.s32.totalorder %s140, %s142
      %p146 = scmp.eq.s32.totalorder %s22, 0
      %p147 = por %p145, %p146
      %p148 = scmp.ne.s32.totalorder %s140, %s142
      %p149 = scmp.eq.s32.totalorder %s27, 1
      %p150 = por %p148, %p149
      %p151 = scmp.ne.s32.totalorder %s142, %s143
      %p152 = scmp.eq.s32.totalorder %s27, 0
      %p153 = por %p151, %p152
      %p154 = scmp.ne.s32.totalorder %s142, %s143
      %p155 = scmp.eq.s32.totalorder %s28, 1
      %p156 = por %p154, %p155
      %p158 = scmp.ne.s32.totalorder %s143, %s157
      %p159 = scmp.eq.s32.totalorder %s28, 0
      %p160 = por %p158, %p159
      %s162 = sadd.s32 %s161, 1
      %p165 = scmp.eq.s32.totalorder %s22, 1
      %p166 = scmp.ne.s32.totalorder %s161, %s163
      %p167 = scmp.eq.s32.totalorder %s22, 0
      %p168 = por %p166, %p167
      %p169 = scmp.ne.s32.totalorder %s161, %s163
      %p170 = scmp.eq.s32.totalorder %s27, 1
      %p171 = por %p169, %p170
      %p172 = scmp.ne.s32.totalorder %s163, %s164
      %p173 = scmp.eq.s32.totalorder %s27, 0
      %p174 = por %p172, %p173
      %p175 = scmp.ne.s32.totalorder %s163, %s164
      %p176 = scmp.eq.s32.totalorder %s28, 1
      %p177 = por %p175, %p176
      %p179 = scmp.ne.s32.totalorder %s164, %s178
      %p180 = scmp.eq.s32.totalorder %s28, 0
      %p181 = por %p179, %p180
      %s183 = sadd.s32 %s182, 1
      %p186 = scmp.eq.s32.totalorder %s22, 1
      %p187 = scmp.ne.s32.totalorder %s182, %s184
      %p188 = scmp.eq.s32.totalorder %s22, 0
      %p189 = por %p187, %p188
      %p190 = scmp.ne.s32.totalorder %s182, %s184
      %p191 = scmp.eq.s32.totalorder %s27, 1
      %p192 = por %p190, %p191
      %p193 = scmp.ne.s32.totalorder %s184, %s185
      %p194 = scmp.eq.s32.totalorder %s27, 0
      %p195 = por %p193, %p194
      %p196 = scmp.ne.s32.totalorder %s184, %s185
      %p197 = scmp.eq.s32.totalorder %s28, 1
      %p198 = por %p196, %p197
      %p200 = scmp.ne.s32.totalorder %s185, %s199
      %p201 = scmp.eq.s32.totalorder %s28, 0
      %p202 = por %p200, %p201
      %s204 = sadd.s32 %s203, 1
      %p207 = scmp.eq.s32.totalorder %s22, 1
      %p208 = scmp.ne.s32.totalorder %s203, %s205
      %p209 = scmp.eq.s32.totalorder %s22, 0
      %p210 = por %p208, %p209
      %p211 = scmp.ne.s32.totalorder %s203, %s205
      %p212 = scmp.eq.s32.totalorder %s27, 1
      %p213 = por %p211, %p212
      %p214 = scmp.ne.s32.totalorder %s205, %s206
      %p215 = scmp.eq.s32.totalorder %s27, 0
      %p216 = por %p214, %p215
      %p217 = scmp.ne.s32.totalorder %s205, %s206
      %p218 = scmp.eq.s32.totalorder %s28, 1
      %p219 = por %p217, %p218
      %p221 = scmp.ne.s32.totalorder %s206, %s220
      %p222 = scmp.eq.s32.totalorder %s28, 0
      %p223 = por %p221, %p222
      %s225 = sadd.s32 %s224, 1
      %p228 = scmp.eq.s32.totalorder %s22, 1
      %p229 = scmp.ne.s32.totalorder %s224, %s226
      %p230 = scmp.eq.s32.totalorder %s22, 0
      %p231 = por %p229, %p230
      %p232 = scmp.ne.s32.totalorder %s224, %s226
      %p233 = scmp.eq.s32.totalorder %s27, 1
      %p234 = por %p232, %p233
      %p235 = scmp.ne.s32.totalorder %s226, %s227
      %p236 = scmp.eq.s32.totalorder %s27, 0
      %p237 = por %p235, %p236
      %p238 = scmp.ne.s32.totalorder %s226, %s227
      %p239 = scmp.eq.s32.totalorder %s28, 1
      %p240 = por %p238, %p239
      %p242 = scmp.ne.s32.totalorder %s227, %s241
      %p243 = scmp.eq.s32.totalorder %s28, 0
      %p244 = por %p242, %p243
      %s246 = sadd.s32 %s245, 1
      %p249 = scmp.eq.s32.totalorder %s22, 1
      %p250 = scmp.ne.s32.totalorder %s245, %s247
      %p251 = scmp.eq.s32.totalorder %s22, 0
      %p252 = por %p250, %p251
      %p253 = scmp.ne.s32.totalorder %s245, %s247
      %p254 = scmp.eq.s32.totalorder %s27, 1
      %p255 = por %p253, %p254
      %p256 = scmp.ne.s32.totalorder %s247, %s248
      %p257 = scmp.eq.s32.totalorder %s27, 0
      %p258 = por %p256, %p257
      %p259 = scmp.ne.s32.totalorder %s247, %s248
      %p260 = scmp.eq.s32.totalorder %s28, 1
      %p261 = por %p259, %p260
      %p263 = scmp.ne.s32.totalorder %s248, %s262
      %p264 = scmp.eq.s32.totalorder %s28, 0
      %p265 = por %p263, %p264
      %s266 = ssub.s32 %s22, %s29
      %p267 = scmp.eq.s32.totalorder %s266, 0
      %s269 = sadd.s32 %s268, 1
      %s270 = scalar_select %p267, %s268, %s269
      %p273 = pneg %p267
      %p274 = scmp.eq.s32.totalorder %s22, 1
      %p275 = por %p273, %p274
      %p276 = scmp.ne.s32.totalorder %s268, %s271
      %p277 = scmp.eq.s32.totalorder %s22, 0
      %p278 = por %p276, %p277
      %p279 = scmp.ne.s32.totalorder %s268, %s271
      %p280 = scmp.eq.s32.totalorder %s27, 1
      %p281 = por %p279, %p280
      %p282 = scmp.ne.s32.totalorder %s271, %s272
      %p283 = scmp.eq.s32.totalorder %s27, 0
      %p284 = por %p282, %p283
      %p285 = scmp.ne.s32.totalorder %s271, %s272
      %p286 = scmp.eq.s32.totalorder %s28, 1
      %p287 = por %p285, %p286
      %p289 = scmp.ne.s32.totalorder %s272, %s288
      %p290 = scmp.eq.s32.totalorder %s28, 0
      %p291 = por %p289, %p290
      %p292 = scmp.le.s32.totalorder 1, %s22
      %p293 = scmp.lt.s32.totalorder %s22, 3
      %p294 = pnand %p292, %p293
      %p295 = pneg %p294
      // Predicated region
      $region9: #{tpu_custom_call.1} parent=5 // pred_check
        _
      $region10: #{tpu_custom_call.1} parent=5 // pred_check_branch
        %297 = sbr.rel (%p294) target = $region12
      $region11: #{tpu_custom_call.1} parent=5 // pred_region
        %s298 = ssub.s32 %s22, 1
        // Predicated region
        $region13: #{tpu_custom_call.1} parent=11 // pred_check
          %p299 = pneg %p69
        $region14: #{tpu_custom_call.1} parent=11 // pred_check_branch
          %301 = sbr.rel (%p299) target = $region16
        $region15: #{tpu_custom_call.1} parent=11 // pred_region
          %s303 = ssub.s32 128, 128
          %304 = vsyncadd [#allocation3], %s303
          %s306 = sshll.u32 [#allocation2], 4
          %s307 = int_to_ptr.vmem [resolvable:$true] %s306
          %309 = dma.hbm_to_vmem [thread:$0]  %s1, 128, %s307, [#allocation3]
        $region16: #{tpu_custom_call.1} parent=11 // pred_fallthru
          _
        // Predicated region
        $region17: #{tpu_custom_call.1} parent=11 // pred_check
          %p310 = pneg %p90
        $region18: #{tpu_custom_call.1} parent=11 // pred_check_branch
          %312 = sbr.rel (%p310) target = $region20
        $region19: #{tpu_custom_call.1} parent=11 // pred_region
          %s314 = ssub.s32 256, 256
          %315 = vsyncadd [#allocation6], %s314
          %s316 = sshll.u32 [#allocation5], 4
          %s317 = int_to_ptr.vmem [resolvable:$true] %s316
          %322 = dma.hbm_to_vmem [thread:$0]  %s2, 256, %s317, [#allocation6], 128, 128, 8
        $region20: #{tpu_custom_call.1} parent=11 // pred_fallthru
          _
        // Predicated region
        $region21: #{tpu_custom_call.1} parent=11 // pred_check
          %p323 = pneg %p111
        $region22: #{tpu_custom_call.1} parent=11 // pred_check_branch
          %325 = sbr.rel (%p323) target = $region24
        $region23: #{tpu_custom_call.1} parent=11 // pred_region
          %s327 = ssub.s32 128, 128
          %328 = vsyncadd [#allocation6], %s327
          %s330 = sshll.u32 [#allocation7], 4
          %s331 = int_to_ptr.vmem [resolvable:$true] %s330
          %333 = dma.hbm_to_vmem [thread:$0]  %s3, 128, %s331, [#allocation6]
        $region24: #{tpu_custom_call.1} parent=11 // pred_fallthru
          _
        // Predicated region
        $region25: #{tpu_custom_call.1} parent=11 // pred_check
          %p334 = pneg %p132
        $region26: #{tpu_custom_call.1} parent=11 // pred_check_branch
          %336 = sbr.rel (%p334) target = $region28
        $region27: #{tpu_custom_call.1} parent=11 // pred_region
          _
        $region28: #{tpu_custom_call.1} parent=11 // pred_fallthru
          _
        // Predicated region
        $region29: #{tpu_custom_call.1} parent=11 // pred_check
          %p337 = pneg %p153
        $region30: #{tpu_custom_call.1} parent=11 // pred_check_branch
          %339 = sbr.rel (%p337) target = $region32
        $region31: #{tpu_custom_call.1} parent=11 // pred_region
          _
        $region32: #{tpu_custom_call.1} parent=11 // pred_fallthru
          _
        // Predicated region
        $region33: #{tpu_custom_call.1} parent=11 // pred_check
          %p340 = pneg %p174
        $region34: #{tpu_custom_call.1} parent=11 // pred_check_branch
          %342 = sbr.rel (%p340) target = $region36
        $region35: #{tpu_custom_call.1} parent=11 // pred_region
          _
        $region36: #{tpu_custom_call.1} parent=11 // pred_fallthru
          _
        // Predicated region
        $region37: #{tpu_custom_call.1} parent=11 // pred_check
          %p343 = pneg %p195
        $region38: #{tpu_custom_call.1} parent=11 // pred_check_branch
          %345 = sbr.rel (%p343) target = $region40
        $region39: #{tpu_custom_call.1} parent=11 // pred_region
          _
        $region40: #{tpu_custom_call.1} parent=11 // pred_fallthru
          _
        // Predicated region
        $region41: #{tpu_custom_call.1} parent=11 // pred_check
          %p346 = pneg %p216
        $region42: #{tpu_custom_call.1} parent=11 // pred_check_branch
          %348 = sbr.rel (%p346) target = $region44
        $region43: #{tpu_custom_call.1} parent=11 // pred_region
          _
        $region44: #{tpu_custom_call.1} parent=11 // pred_fallthru
          _
        // Predicated region
        $region45: #{tpu_custom_call.1} parent=11 // pred_check
          %p349 = pneg %p237
        $region46: #{tpu_custom_call.1} parent=11 // pred_check_branch
          %351 = sbr.rel (%p349) target = $region48
        $region47: #{tpu_custom_call.1} parent=11 // pred_region
          _
        $region48: #{tpu_custom_call.1} parent=11 // pred_fallthru
          _
        // Predicated region
        $region49: #{tpu_custom_call.1} parent=11 // pred_check
          %p352 = pneg %p258
        $region50: #{tpu_custom_call.1} parent=11 // pred_check_branch
          %354 = sbr.rel (%p352) target = $region52
        $region51: #{tpu_custom_call.1} parent=11 // pred_region
          _
        $region52: #{tpu_custom_call.1} parent=11 // pred_fallthru
          _
      $region12: #{tpu_custom_call.1} parent=5 // pred_fallthru
        _
      %p355 = scmp.lt.s32.totalorder %s22, 2
      // Predicated region
      $region53: #{tpu_custom_call.1} parent=5 // pred_check
        %p356 = pneg %p355
      $region54: #{tpu_custom_call.1} parent=5 // pred_check_branch
        %358 = sbr.rel (%p356) target = $region56
      $region55: #{tpu_custom_call.1} parent=5 // pred_region
        // Predicated region
        $region57: #{tpu_custom_call.1} parent=55 // pred_check
          %p359 = pneg %p42
        $region58: #{tpu_custom_call.1} parent=55 // pred_check_branch
          %361 = sbr.rel (%p359) target = $region60
        $region59: #{tpu_custom_call.1} parent=55 // pred_region
          %p362 = scmp.lt.s32.totalorder %s22, 1
          %s363 = scalar_select %p362, %s22, 1
          %s364 = smul.addr %s363, 16
          %s365 = smul.addr %s364, 4
          %s366 = scalar_lea.vmem %s0, %s365
        $region60: #{tpu_custom_call.1} parent=55 // pred_fallthru
          _
      $region56: #{tpu_custom_call.1} parent=5 // pred_fallthru
        _
      %p367 = scmp.le.s32.totalorder 1, %s22
      %p368 = scmp.lt.s32.totalorder %s22, 3
      %p369 = pnand %p367, %p368
      %p370 = pneg %p369
      // Predicated region
      $region61: #{tpu_custom_call.1} parent=5 // pred_check
        _
      $region62: #{tpu_custom_call.1} parent=5 // pred_check_branch
        %372 = sbr.rel (%p369) target = $region64
      $region63: #{tpu_custom_call.1} parent=5 // pred_region
        %s373 = ssub.s32 %s22, 1
        // Predicated region
        $region65: #{tpu_custom_call.1} parent=63 // pred_check
          %p374 = pneg %p69
        $region66: #{tpu_custom_call.1} parent=63 // pred_check_branch
          %376 = sbr.rel (%p374) target = $region68
        $region67: #{tpu_custom_call.1} parent=63 // pred_region
          %377 = dma.done [#allocation3], 128
        $region68: #{tpu_custom_call.1} parent=63 // pred_fallthru
          _
        // Predicated region
        $region69: #{tpu_custom_call.1} parent=63 // pred_check
          %p378 = pneg %p90
        $region70: #{tpu_custom_call.1} parent=63 // pred_check_branch
          %380 = sbr.rel (%p378) target = $region72
        $region71: #{tpu_custom_call.1} parent=63 // pred_region
          %381 = dma.done [#allocation6], 256
        $region72: #{tpu_custom_call.1} parent=63 // pred_fallthru
          _
        // Predicated region
        $region73: #{tpu_custom_call.1} parent=63 // pred_check
          %p382 = pneg %p111
        $region74: #{tpu_custom_call.1} parent=63 // pred_check_branch
          %384 = sbr.rel (%p382) target = $region76
        $region75: #{tpu_custom_call.1} parent=63 // pred_region
          %385 = dma.done [#allocation6], 128
        $region76: #{tpu_custom_call.1} parent=63 // pred_fallthru
          _
        %p386 = scmp.lt.s32.totalorder %s27, 1
        %s387 = scalar_select %p386, %s27, 1
        %s388 = smul.addr %s387, 16
        %s389 = smul.addr %s388, 4
        %s390 = scalar_lea.vmem %s0, %s389
        %p391 = pneg %p48
        %p392 = pneg %p45
        %p393 = pneg %p69
        %p394 = pneg %p66
        %p395 = pneg %p90
        %p396 = pneg %p87
        %p397 = pneg %p111
        %p398 = pneg %p108
        %p399 = pneg %p132
        %p400 = pneg %p129
        %p401 = pneg %p153
        %p402 = pneg %p150
        %p403 = pneg %p174
        %p404 = pneg %p171
        %p405 = pneg %p195
        %p406 = pneg %p192
        %p407 = pneg %p216
        %p408 = pneg %p213
        %p409 = pneg %p237
        %p410 = pneg %p234
        %p411 = pneg %p258
        %p412 = pneg %p255
        %p413 = pneg %p284
        %p414 = pneg %p281
        %s415 = sand.u32 %s271, 1
        %s416 = scalar_lea.sflag [#allocation4], %s415
        %s417 = sand.u32 %s271, 1
        %s418 = smul.addr %s417, 64
        %s419 = scalar_lea.vmem [#allocation8], %s418
        %p420 = scmp.lt.s32.totalorder %s27, 1
        %s421 = scalar_select %p420, %s27, 1
        %s422 = smul.addr %s421, 16
        %s423 = smul.addr %s422, 4
        %s424 = scalar_lea.vmem %s0, %s423
        %v425 = vld [vmem:[%s424] sm:$0xf]
        %v426 = vld [vmem:[%s424 + $0x4] sm:$0xf]
        %v427 = vld [vmem:[%s424 + $0x8] sm:$0xf]
        %v428 = vld [vmem:[%s424 + $0xc] sm:$0xf]
        %v429 = vld [vmem:[%s424 + $0x10] sm:$0xf]
        %v430 = vld [vmem:[%s424 + $0x14] sm:$0xf]
        %v431 = vld [vmem:[%s424 + $0x18] sm:$0xf]
        %v432 = vld [vmem:[%s424 + $0x1c] sm:$0xf]
        %v433 = vld [vmem:[%s424 + $0x20] sm:$0xf]
        %v434 = vld [vmem:[%s424 + $0x24] sm:$0xf]
        %v435 = vld [vmem:[%s424 + $0x28] sm:$0xf]
        %v436 = vld [vmem:[%s424 + $0x2c] sm:$0xf]
        %v437 = vld [vmem:[%s424 + $0x30] sm:$0xf]
        %v438 = vld [vmem:[%s424 + $0x34] sm:$0xf]
        %v439 = vld [vmem:[%s424 + $0x38] sm:$0xf]
        %v440 = vld [vmem:[%s424 + $0x3c] sm:$0xf]
        %vm441 = vcmask 1043456
        %v442 = vsel %vm441, %v425, 0.0
        %443 = vadd.xlane.f32.xlu0 %v442
        %v444 = vpop.xlane.xlu0 %443
        %v445 = vsel %vm441, %v426, 0.0
        %446 = vadd.xlane.f32.xlu0 %v445
        %v447 = vpop.xlane.xlu0 %446
        %v448 = vsel %vm441, %v427, 0.0
        %449 = vadd.xlane.f32.xlu0 %v448
        %v450 = vpop.xlane.xlu0 %449
        %v451 = vsel %vm441, %v428, 0.0
        %452 = vadd.xlane.f32.xlu0 %v451
        %v453 = vpop.xlane.xlu0 %452
        %v454 = vsel %vm441, %v429, 0.0
        %455 = vadd.xlane.f32.xlu0 %v454
        %v456 = vpop.xlane.xlu0 %455
        %v457 = vsel %vm441, %v430, 0.0
        %458 = vadd.xlane.f32.xlu0 %v457
        %v459 = vpop.xlane.xlu0 %458
        %v460 = vsel %vm441, %v431, 0.0
        %461 = vadd.xlane.f32.xlu0 %v460
        %v462 = vpop.xlane.xlu0 %461
        %v463 = vsel %vm441, %v432, 0.0
        %464 = vadd.xlane.f32.xlu0 %v463
        %v465 = vpop.xlane.xlu0 %464
        %v466 = vsel %vm441, %v433, 0.0
        %467 = vadd.xlane.f32.xlu0 %v466
        %v468 = vpop.xlane.xlu0 %467
        %v469 = vsel %vm441, %v434, 0.0
        %470 = vadd.xlane.f32.xlu0 %v469
        %v471 = vpop.xlane.xlu0 %470
        %v472 = vsel %vm441, %v435, 0.0
        %473 = vadd.xlane.f32.xlu0 %v472
        %v474 = vpop.xlane.xlu0 %473
        %v475 = vsel %vm441, %v436, 0.0
        %476 = vadd.xlane.f32.xlu0 %v475
        %v477 = vpop.xlane.xlu0 %476
        %v478 = vsel %vm441, %v437, 0.0
        %479 = vadd.xlane.f32.xlu0 %v478
        %v480 = vpop.xlane.xlu0 %479
        %v481 = vsel %vm441, %v438, 0.0
        %482 = vadd.xlane.f32.xlu0 %v481
        %v483 = vpop.xlane.xlu0 %482
        %v484 = vsel %vm441, %v439, 0.0
        %485 = vadd.xlane.f32.xlu0 %v484
        %v486 = vpop.xlane.xlu0 %485
        %v487 = vsel %vm441, %v440, 0.0
        %488 = vadd.xlane.f32.xlu0 %v487
        %v489 = vpop.xlane.xlu0 %488
        %v490 = vmul.f32 %v444, 0.0078125
        %v491 = vmul.f32 %v447, 0.0078125
        %v492 = vmul.f32 %v450, 0.0078125
        %v493 = vmul.f32 %v453, 0.0078125
        %v494 = vmul.f32 %v456, 0.0078125
        %v495 = vmul.f32 %v459, 0.0078125
        %v496 = vmul.f32 %v462, 0.0078125
        %v497 = vmul.f32 %v465, 0.0078125
        %v498 = vmul.f32 %v468, 0.0078125
        %v499 = vmul.f32 %v471, 0.0078125
        %v500 = vmul.f32 %v474, 0.0078125
        %v501 = vmul.f32 %v477, 0.0078125
        %v502 = vmul.f32 %v480, 0.0078125
        %v503 = vmul.f32 %v483, 0.0078125
        %v504 = vmul.f32 %v486, 0.0078125
        %v505 = vmul.f32 %v489, 0.0078125
        %v506 = vrot.slane %v442, 4
        %v507 = vadd.f32 %v442, %v506
        %v508 = vrot.slane %v507, 2
        %v509 = vadd.f32 %v507, %v508
        %v510 = vrot.slane %v509, 1
        %v511 = vadd.f32 %v509, %v510
        %v512 = vrot.slane %v445, 4
        %v513 = vadd.f32 %v445, %v512
        %v514 = vrot.slane %v513, 2
        %v515 = vadd.f32 %v513, %v514
        %v516 = vrot.slane %v515, 1
        %v517 = vadd.f32 %v515, %v516
        %v518 = vrot.slane %v448, 4
        %v519 = vadd.f32 %v448, %v518
        %v520 = vrot.slane %v519, 2
        %v521 = vadd.f32 %v519, %v520
        %v522 = vrot.slane %v521, 1
        %v523 = vadd.f32 %v521, %v522
        %v524 = vrot.slane %v451, 4
        %v525 = vadd.f32 %v451, %v524
        %v526 = vrot.slane %v525, 2
        %v527 = vadd.f32 %v525, %v526
        %v528 = vrot.slane %v527, 1
        %v529 = vadd.f32 %v527, %v528
        %v530 = vrot.slane %v454, 4
        %v531 = vadd.f32 %v454, %v530
        %v532 = vrot.slane %v531, 2
        %v533 = vadd.f32 %v531, %v532
        %v534 = vrot.slane %v533, 1
        %v535 = vadd.f32 %v533, %v534
        %v536 = vrot.slane %v457, 4
        %v537 = vadd.f32 %v457, %v536
        %v538 = vrot.slane %v537, 2
        %v539 = vadd.f32 %v537, %v538
        %v540 = vrot.slane %v539, 1
        %v541 = vadd.f32 %v539, %v540
        %v542 = vrot.slane %v460, 4
        %v543 = vadd.f32 %v460, %v542
        %v544 = vrot.slane %v543, 2
        %v545 = vadd.f32 %v543, %v544
        %v546 = vrot.slane %v545, 1
        %v547 = vadd.f32 %v545, %v546
        %v548 = vrot.slane %v463, 4
        %v549 = vadd.f32 %v463, %v548
        %v550 = vrot.slane %v549, 2
        %v551 = vadd.f32 %v549, %v550
        %v552 = vrot.slane %v551, 1
        %v553 = vadd.f32 %v551, %v552
        %v554 = vrot.slane %v466, 4
        %v555 = vadd.f32 %v466, %v554
        %v556 = vrot.slane %v555, 2
        %v557 = vadd.f32 %v555, %v556
        %v558 = vrot.slane %v557, 1
        %v559 = vadd.f32 %v557, %v558
        %v560 = vrot.slane %v469, 4
        %v561 = vadd.f32 %v469, %v560
        %v562 = vrot.slane %v561, 2
        %v563 = vadd.f32 %v561, %v562
        %v564 = vrot.slane %v563, 1
        %v565 = vadd.f32 %v563, %v564
        %v566 = vrot.slane %v472, 4
        %v567 = vadd.f32 %v472, %v566
        %v568 = vrot.slane %v567, 2
        %v569 = vadd.f32 %v567, %v568
        %v570 = vrot.slane %v569, 1
        %v571 = vadd.f32 %v569, %v570
        %v572 = vrot.slane %v475, 4
        %v573 = vadd.f32 %v475, %v572
        %v574 = vrot.slane %v573, 2
        %v575 = vadd.f32 %v573, %v574
        %v576 = vrot.slane %v575, 1
        %v577 = vadd.f32 %v575, %v576
        %v578 = vrot.slane %v478, 4
        %v579 = vadd.f32 %v478, %v578
        %v580 = vrot.slane %v579, 2
        %v581 = vadd.f32 %v579, %v580
        %v582 = vrot.slane %v581, 1
        %v583 = vadd.f32 %v581, %v582
        %v584 = vrot.slane %v481, 4
        %v585 = vadd.f32 %v481, %v584
        %v586 = vrot.slane %v585, 2
        %v587 = vadd.f32 %v585, %v586
        %v588 = vrot.slane %v587, 1
        %v589 = vadd.f32 %v587, %v588
        %v590 = vrot.slane %v484, 4
        %v591 = vadd.f32 %v484, %v590
        %v592 = vrot.slane %v591, 2
        %v593 = vadd.f32 %v591, %v592
        %v594 = vrot.slane %v593, 1
        %v595 = vadd.f32 %v593, %v594
        %v596 = vrot.slane %v487, 4
        %v597 = vadd.f32 %v487, %v596
        %v598 = vrot.slane %v597, 2
        %v599 = vadd.f32 %v597, %v598
        %v600 = vrot.slane %v599, 1
        %v601 = vadd.f32 %v599, %v600
        %v602 = vld [vmem:[#allocation2] sm:$0xff]
        %v603 = vld [vmem:[#allocation5] sm:$0xff]
        %v604 = vld [vmem:[#allocation5 + $0x8] sm:$0xff]
        %vm621 = vcmask 1041409
        %v622 = vsel %vm621, %v517, %v511
        %vm623 = vcmask 1042434
        %v624 = vsel %vm623, %v523, %v622
        %vm625 = vcmask 1043459
        %v626 = vsel %vm625, %v529, %v624
        %vm627 = vcmask 1044484
        %v628 = vsel %vm627, %v535, %v626
        %vm629 = vcmask 1045509
        %v630 = vsel %vm629, %v541, %v628
        %vm631 = vcmask 1046534
        %v632 = vsel %vm631, %v547, %v630
        %vm633 = vcmask 1047559
        %v634 = vsel %vm633, %v553, %v632
        %v635 = vsel %vm621, %v565, %v559
        %v636 = vsel %vm623, %v571, %v635
        %v637 = vsel %vm625, %v577, %v636
        %v638 = vsel %vm627, %v583, %v637
        %v639 = vsel %vm629, %v589, %v638
        %v640 = vsel %vm631, %v595, %v639
        %v641 = vsel %vm633, %v601, %v640
        %644 = vmatprep.subr.mxu0 0.0
        %645 = vmatpush1.xpose.msra.mxu0 %v602
        %646 = vmatprep.subr.mxu0 0.0
        %647 = vmatpush1.xpose.msra.mxu0 0.0
        %648 = vmatprep.subr.mxu0 0.0
        %649 = vmatpush1.xpose.msra.mxu0 0.0
        %650 = vmatprep.subr.mxu0 0.0
        %651 = vmatpush1.xpose.msra.mxu0 0.0
        %652 = vmatprep.subr.mxu0 0.0
        %653 = vmatpush1.xpose.msra.mxu0 0.0
        %654 = vmatprep.subr.mxu0 0.0
        %655 = vmatpush1.xpose.msra.mxu0 0.0
        %656 = vmatprep.subr.mxu0 0.0
        %657 = vmatpush1.xpose.msra.mxu0 0.0
        %658 = vmatprep.subr.mxu0 0.0
        %659 = vmatpush1.xpose.msra.mxu0 0.0
        %660 = vmatprep.subr.mxu0 0.0
        %661 = vmatpush1.xpose.msra.mxu0 0.0
        %662 = vmatprep.subr.mxu0 0.0
        %663 = vmatpush1.xpose.msra.mxu0 0.0
        %664 = vmatprep.subr.mxu0 0.0
        %665 = vmatpush1.xpose.msra.mxu0 0.0
        %666 = vmatprep.subr.mxu0 0.0
        %667 = vmatpush1.xpose.msra.mxu0 0.0
        %668 = vmatprep.subr.mxu0 0.0
        %669 = vmatpush1.xpose.msra.mxu0 0.0
        %670 = vmatprep.subr.mxu0 0.0
        %671 = vmatpush1.xpose.msra.mxu0 0.0
        %672 = vmatprep.subr.mxu0 0.0
        %673 = vmatpush1.xpose.msra.mxu0 0.0
        %674 = vmatprep.subr.mxu0 0.0
        %675 = vmatpush1.xpose.msra.mxu0 0.0
        %676 = vmatprep.subr.mxu0 0.0
        %677 = vmatpush1.xpose.msra.mxu0 0.0
        %678 = vmatprep.subr.mxu0 0.0
        %679 = vmatpush1.xpose.msra.mxu0 0.0
        %680 = vmatprep.subr.mxu0 0.0
        %681 = vmatpush1.xpose.msra.mxu0 0.0
        %682 = vmatprep.subr.mxu0 0.0
        %683 = vmatpush1.xpose.msra.mxu0 0.0
        %684 = vmatprep.subr.mxu0 0.0
        %685 = vmatpush1.xpose.msra.mxu0 0.0
        %686 = vmatprep.subr.mxu0 0.0
        %687 = vmatpush1.xpose.msra.mxu0 0.0
        %688 = vmatprep.subr.mxu0 0.0
        %689 = vmatpush1.xpose.msra.mxu0 0.0
        %690 = vmatprep.subr.mxu0 0.0
        %691 = vmatpush1.xpose.msra.mxu0 0.0
        %692 = vmatprep.subr.mxu0 0.0
        %693 = vmatpush1.xpose.msra.mxu0 0.0
        %694 = vmatprep.subr.mxu0 0.0
        %695 = vmatpush1.xpose.msra.mxu0 0.0
        %696 = vmatprep.subr.mxu0 0.0
        %697 = vmatpush1.xpose.msra.mxu0 0.0
        %698 = vmatprep.subr.mxu0 0.0
        %699 = vmatpush1.xpose.msra.mxu0 0.0
        %700 = vmatprep.subr.mxu0 0.0
        %701 = vmatpush1.xpose.msra.mxu0 0.0
        %702 = vmatprep.subr.mxu0 0.0
        %703 = vmatpush1.xpose.msra.mxu0 0.0
        %704 = vmatprep.subr.mxu0 0.0
        %705 = vmatpush1.xpose.msra.mxu0 0.0
        %706 = vmatprep.subr.mxu0 0.0
        %707 = vmatpush1.xpose.msra.mxu0 0.0
        %708 = vmatprep.mubr.f32.mxu0 0.0
        %709 = vmatmul.mubr.f32.gmra.mrb[0].mxu0 %v634
        %v710 = vpop.f32.mrb[0].mxu0
        %v711 = vadd.f32 0.0, %v710
        %v712 = vpop.f32.mrb[0].mxu0
        %713 = vmatprep.mubr.f32.mxu0 0.0
        %714 = vmatmul.mubr.f32.gmra.mrb[0].mxu0 %v641
        %v715 = vpop.f32.mrb[0].mxu0
        %v716 = vadd.f32 0.0, %v715
        %v717 = vpop.f32.mrb[0].mxu0
        %718 = vdwg.mxu0
        %v719 = vmul.f32 %v711, 0.015625
        %v720 = vmul.f32 %v716, 0.015625
        %721 = vmatprep.subr.mxu0 0.0
        %722 = vmatpush1.xpose.msra.mxu0 %v603
        %723 = vmatprep.subr.mxu0 0.0
        %724 = vmatpush1.xpose.msra.mxu0 %v604
        %725 = vmatprep.subr.mxu0 0.0
        %726 = vmatpush1.xpose.msra.mxu0 0.0
        %727 = vmatprep.subr.mxu0 0.0
        %728 = vmatpush1.xpose.msra.mxu0 0.0
        %729 = vmatprep.subr.mxu0 0.0
        %730 = vmatpush1.xpose.msra.mxu0 0.0
        %731 = vmatprep.subr.mxu0 0.0
        %732 = vmatpush1.xpose.msra.mxu0 0.0
        %733 = vmatprep.subr.mxu0 0.0
        %734 = vmatpush1.xpose.msra.mxu0 0.0
        %735 = vmatprep.subr.mxu0 0.0
        %736 = vmatpush1.xpose.msra.mxu0 0.0
        %737 = vmatprep.subr.mxu0 0.0
        %738 = vmatpush1.xpose.msra.mxu0 0.0
        %739 = vmatprep.subr.mxu0 0.0
        %740 = vmatpush1.xpose.msra.mxu0 0.0
        %741 = vmatprep.subr.mxu0 0.0
        %742 = vmatpush1.xpose.msra.mxu0 0.0
        %743 = vmatprep.subr.mxu0 0.0
        %744 = vmatpush1.xpose.msra.mxu0 0.0
        %745 = vmatprep.subr.mxu0 0.0
        %746 = vmatpush1.xpose.msra.mxu0 0.0
        %747 = vmatprep.subr.mxu0 0.0
        %748 = vmatpush1.xpose.msra.mxu0 0.0
        %749 = vmatprep.subr.mxu0 0.0
        %750 = vmatpush1.xpose.msra.mxu0 0.0
        %751 = vmatprep.subr.mxu0 0.0
        %752 = vmatpush1.xpose.msra.mxu0 0.0
        %753 = vmatprep.subr.mxu0 0.0
        %754 = vmatpush1.xpose.msra.mxu0 0.0
        %755 = vmatprep.subr.mxu0 0.0
        %756 = vmatpush1.xpose.msra.mxu0 0.0
        %757 = vmatprep.subr.mxu0 0.0
        %758 = vmatpush1.xpose.msra.mxu0 0.0
        %759 = vmatprep.subr.mxu0 0.0
        %760 = vmatpush1.xpose.msra.mxu0 0.0
        %761 = vmatprep.subr.mxu0 0.0
        %762 = vmatpush1.xpose.msra.mxu0 0.0
        %763 = vmatprep.subr.mxu0 0.0
        %764 = vmatpush1.xpose.msra.mxu0 0.0
        %765 = vmatprep.subr.mxu0 0.0
        %766 = vmatpush1.xpose.msra.mxu0 0.0
        %767 = vmatprep.subr.mxu0 0.0
        %768 = vmatpush1.xpose.msra.mxu0 0.0
        %769 = vmatprep.subr.mxu0 0.0
        %770 = vmatpush1.xpose.msra.mxu0 0.0
        %771 = vmatprep.subr.mxu0 0.0
        %772 = vmatpush1.xpose.msra.mxu0 0.0
        %773 = vmatprep.subr.mxu0 0.0
        %774 = vmatpush1.xpose.msra.mxu0 0.0
        %775 = vmatprep.subr.mxu0 0.0
        %776 = vmatpush1.xpose.msra.mxu0 0.0
        %777 = vmatprep.subr.mxu0 0.0
        %778 = vmatpush1.xpose.msra.mxu0 0.0
        %779 = vmatprep.subr.mxu0 0.0
        %780 = vmatpush1.xpose.msra.mxu0 0.0
        %781 = vmatprep.subr.mxu0 0.0
        %782 = vmatpush1.xpose.msra.mxu0 0.0
        %783 = vmatprep.subr.mxu0 0.0
        %784 = vmatpush1.xpose.msra.mxu0 0.0
        %785 = vmatprep.mubr.f32.mxu0 0.0
        %786 = vmatmul.mubr.f32.gmra.mrb[0].mxu0 %v634
        %v787 = vpop.f32.mrb[0].mxu0
        %v788 = vadd.f32 0.0, %v787
        %v789 = vpop.f32.mrb[0].mxu0
        %790 = vmatprep.mubr.f32.mxu0 0.0
        %791 = vmatmul.mubr.f32.gmra.mrb[0].mxu0 %v641
        %v792 = vpop.f32.mrb[0].mxu0
        %v793 = vadd.f32 0.0, %v792
        %v794 = vpop.f32.mrb[0].mxu0
        %795 = vdwg.mxu0
        %v796 = vmul.f32 %v788, 0.03125
        %v797 = vmul.f32 %v793, 0.03125
        %v798 = vld [vmem:[#allocation7] sm:$0xff]
        %v799 = vld [vmem:[%s4] sm:$0xff]
        %801 = vset.pattern.permute.xlu0 0
        %802 = vperm.xlu0 %801, %v799
        %v803 = vpop.permute.xlu0 %802
        %v821 = vlaneseq
        %v822 = vand.u32 %v821, 127
        %v823 = vlaneseq
        %v824 = vshrl.u32 %v823, 7
        %v825 = vsub.s32 %v822, %v824
        %v826 = vrot.slane %v490, %v825
        %v827 = vlaneseq
        %v828 = vshrl.u32 %v827, 7
        %v829 = vsub.s32 %v822, %v828
        %v830 = vrot.slane %v491, %v829
        %v831 = vlaneseq
        %v832 = vshrl.u32 %v831, 7
        %v833 = vsub.s32 %v822, %v832
        %v834 = vrot.slane %v492, %v833
        %v835 = vlaneseq
        %v836 = vshrl.u32 %v835, 7
        %v837 = vsub.s32 %v822, %v836
        %v838 = vrot.slane %v493, %v837
        %v839 = vlaneseq
        %v840 = vshrl.u32 %v839, 7
        %v841 = vsub.s32 %v822, %v840
        %v842 = vrot.slane %v494, %v841
        %v843 = vlaneseq
        %v844 = vshrl.u32 %v843, 7
        %v845 = vsub.s32 %v822, %v844
        %v846 = vrot.slane %v495, %v845
        %v847 = vlaneseq
        %v848 = vshrl.u32 %v847, 7
        %v849 = vsub.s32 %v822, %v848
        %v850 = vrot.slane %v496, %v849
        %v851 = vlaneseq
        %v852 = vshrl.u32 %v851, 7
        %v853 = vsub.s32 %v822, %v852
        %v854 = vrot.slane %v497, %v853
        %v855 = vlaneseq
        %v856 = vshrl.u32 %v855, 7
        %v857 = vsub.s32 %v822, %v856
        %v858 = vrot.slane %v498, %v857
        %v859 = vlaneseq
        %v860 = vshrl.u32 %v859, 7
        %v861 = vsub.s32 %v822, %v860
        %v862 = vrot.slane %v499, %v861
        %v863 = vlaneseq
        %v864 = vshrl.u32 %v863, 7
        %v865 = vsub.s32 %v822, %v864
        %v866 = vrot.slane %v500, %v865
        %v867 = vlaneseq
        %v868 = vshrl.u32 %v867, 7
        %v869 = vsub.s32 %v822, %v868
        %v870 = vrot.slane %v501, %v869
        %v871 = vlaneseq
        %v872 = vshrl.u32 %v871, 7
        %v873 = vsub.s32 %v822, %v872
        %v874 = vrot.slane %v502, %v873
        %v875 = vlaneseq
        %v876 = vshrl.u32 %v875, 7
        %v877 = vsub.s32 %v822, %v876
        %v878 = vrot.slane %v503, %v877
        %v879 = vlaneseq
        %v880 = vshrl.u32 %v879, 7
        %v881 = vsub.s32 %v822, %v880
        %v882 = vrot.slane %v504, %v881
        %v883 = vlaneseq
        %v884 = vshrl.u32 %v883, 7
        %v885 = vsub.s32 %v822, %v884
        %v886 = vrot.slane %v505, %v885
        %v887 = vsel %vm621, %v830, %v826
        %v888 = vsel %vm623, %v834, %v887
        %v889 = vsel %vm625, %v838, %v888
        %v890 = vsel %vm627, %v842, %v889
        %v891 = vsel %vm629, %v846, %v890
        %v892 = vsel %vm631, %v850, %v891
        %v893 = vsel %vm633, %v854, %v892
        %v894 = vsel %vm621, %v862, %v858
        %v895 = vsel %vm623, %v866, %v894
        %v896 = vsel %vm625, %v870, %v895
        %v897 = vsel %vm627, %v874, %v896
        %v898 = vsel %vm629, %v878, %v897
        %v899 = vsel %vm631, %v882, %v898
        %v900 = vsel %vm633, %v886, %v899
        %vm903 = vcmask 130048
        %v905 = vsel %vm903, %v798, 0
        %907 = vmatprep.subr.mxu0 0.0
        %908 = vmatpush1.msra.mxu0 %v893
        %909 = vmatprep.subr.mxu0 0.0
        %910 = vmatpush1.msra.mxu0 %v900
        %911 = vmatprep.subr.mxu0 0.0
        %912 = vmatpush1.msra.mxu0 0.0
        %913 = vmatprep.subr.mxu0 0.0
        %914 = vmatpush1.msra.mxu0 0.0
        %915 = vmatprep.subr.mxu0 0.0
        %916 = vmatpush1.msra.mxu0 0.0
        %917 = vmatprep.subr.mxu0 0.0
        %918 = vmatpush1.msra.mxu0 0.0
        %919 = vmatprep.subr.mxu0 0.0
        %920 = vmatpush1.msra.mxu0 0.0
        %921 = vmatprep.subr.mxu0 0.0
        %922 = vmatpush1.msra.mxu0 0.0
        %923 = vmatprep.subr.mxu0 0.0
        %924 = vmatpush1.msra.mxu0 0.0
        %925 = vmatprep.subr.mxu0 0.0
        %926 = vmatpush1.msra.mxu0 0.0
        %927 = vmatprep.subr.mxu0 0.0
        %928 = vmatpush1.msra.mxu0 0.0
        %929 = vmatprep.subr.mxu0 0.0
        %930 = vmatpush1.msra.mxu0 0.0
        %931 = vmatprep.subr.mxu0 0.0
        %932 = vmatpush1.msra.mxu0 0.0
        %933 = vmatprep.subr.mxu0 0.0
        %934 = vmatpush1.msra.mxu0 0.0
        %935 = vmatprep.subr.mxu0 0.0
        %936 = vmatpush1.msra.mxu0 0.0
        %937 = vmatprep.subr.mxu0 0.0
        %938 = vmatpush1.msra.mxu0 0.0
        %939 = vmatprep.subr.mxu0 0.0
        %940 = vmatpush1.msra.mxu0 0.0
        %941 = vmatprep.subr.mxu0 0.0
        %942 = vmatpush1.msra.mxu0 0.0
        %943 = vmatprep.subr.mxu0 0.0
        %944 = vmatpush1.msra.mxu0 0.0
        %945 = vmatprep.subr.mxu0 0.0
        %946 = vmatpush1.msra.mxu0 0.0
        %947 = vmatprep.subr.mxu0 0.0
        %948 = vmatpush1.msra.mxu0 0.0
        %949 = vmatprep.subr.mxu0 0.0
        %950 = vmatpush1.msra.mxu0 0.0
        %951 = vmatprep.subr.mxu0 0.0
        %952 = vmatpush1.msra.mxu0 0.0
        %953 = vmatprep.subr.mxu0 0.0
        %954 = vmatpush1.msra.mxu0 0.0
        %955 = vmatprep.subr.mxu0 0.0
        %956 = vmatpush1.msra.mxu0 0.0
        %957 = vmatprep.subr.mxu0 0.0
        %958 = vmatpush1.msra.mxu0 0.0
        %959 = vmatprep.subr.mxu0 0.0
        %960 = vmatpush1.msra.mxu0 0.0
        %961 = vmatprep.subr.mxu0 0.0
        %962 = vmatpush1.msra.mxu0 0.0
        %963 = vmatprep.subr.mxu0 0.0
        %964 = vmatpush1.msra.mxu0 0.0
        %965 = vmatprep.subr.mxu0 0.0
        %966 = vmatpush1.msra.mxu0 0.0
        %967 = vmatprep.subr.mxu0 0.0
        %968 = vmatpush1.msra.mxu0 0.0
        %969 = vmatprep.subr.mxu0 0.0
        %970 = vmatpush1.msra.mxu0 0.0
        %971 = vmatprep.mubr.f32.mxu0 0.0
        %972 = vmatmul.mubr.f32.gmra.mrb[0].mxu0 %v905
        %v973 = vpop.f32.mrb[0].mxu0
        %v974 = vadd.f32 %v803, %v973
        %v975 = vpop.f32.mrb[0].mxu0
        %976 = vdwg.mxu0
        %v977 = vadd.f32 %v974, 3.0
        %v978 = vmax.f32 %v977, 0.0
        %v979 = vmin.f32 %v978, 6.0
        %v980 = vmul.f32 %v974, %v979
        %v981 = vmul.f32 %v980, 0.16666667
        %982 = vmatprep.subr.mxu0 0.0
        %983 = vmatpush1.msra.mxu0 %v719
        %984 = vmatprep.subr.mxu0 0.0
        %985 = vmatpush1.msra.mxu0 %v720
        %986 = vmatprep.subr.mxu0 0.0
        %987 = vmatpush1.msra.mxu0 0.0
        %988 = vmatprep.subr.mxu0 0.0
        %989 = vmatpush1.msra.mxu0 0.0
        %990 = vmatprep.subr.mxu0 0.0
        %991 = vmatpush1.msra.mxu0 0.0
        %992 = vmatprep.subr.mxu0 0.0
        %993 = vmatpush1.msra.mxu0 0.0
        %994 = vmatprep.subr.mxu0 0.0
        %995 = vmatpush1.msra.mxu0 0.0
        %996 = vmatprep.subr.mxu0 0.0
        %997 = vmatpush1.msra.mxu0 0.0
        %998 = vmatprep.subr.mxu0 0.0
        %999 = vmatpush1.msra.mxu0 0.0
        %1000 = vmatprep.subr.mxu0 0.0
        %1001 = vmatpush1.msra.mxu0 0.0
        %1002 = vmatprep.subr.mxu0 0.0
        %1003 = vmatpush1.msra.mxu0 0.0
        %1004 = vmatprep.subr.mxu0 0.0
        %1005 = vmatpush1.msra.mxu0 0.0
        %1006 = vmatprep.subr.mxu0 0.0
        %1007 = vmatpush1.msra.mxu0 0.0
        %1008 = vmatprep.subr.mxu0 0.0
        %1009 = vmatpush1.msra.mxu0 0.0
        %1010 = vmatprep.subr.mxu0 0.0
        %1011 = vmatpush1.msra.mxu0 0.0
        %1012 = vmatprep.subr.mxu0 0.0
        %1013 = vmatpush1.msra.mxu0 0.0
        %1014 = vmatprep.subr.mxu0 0.0
        %1015 = vmatpush1.msra.mxu0 0.0
        %1016 = vmatprep.subr.mxu0 0.0
        %1017 = vmatpush1.msra.mxu0 0.0
        %1018 = vmatprep.subr.mxu0 0.0
        %1019 = vmatpush1.msra.mxu0 0.0
        %1020 = vmatprep.subr.mxu0 0.0
        %1021 = vmatpush1.msra.mxu0 0.0
        %1022 = vmatprep.subr.mxu0 0.0
        %1023 = vmatpush1.msra.mxu0 0.0
        %1024 = vmatprep.subr.mxu0 0.0
        %1025 = vmatpush1.msra.mxu0 0.0
        %1026 = vmatprep.subr.mxu0 0.0
        %1027 = vmatpush1.msra.mxu0 0.0
        %1028 = vmatprep.subr.mxu0 0.0
        %1029 = vmatpush1.msra.mxu0 0.0
        %1030 = vmatprep.subr.mxu0 0.0
        %1031 = vmatpush1.msra.mxu0 0.0
        %1032 = vmatprep.subr.mxu0 0.0
        %1033 = vmatpush1.msra.mxu0 0.0
        %1034 = vmatprep.subr.mxu0 0.0
        %1035 = vmatpush1.msra.mxu0 0.0
        %1036 = vmatprep.subr.mxu0 0.0
        %1037 = vmatpush1.msra.mxu0 0.0
        %1038 = vmatprep.subr.mxu0 0.0
        %1039 = vmatpush1.msra.mxu0 0.0
        %1040 = vmatprep.subr.mxu0 0.0
        %1041 = vmatpush1.msra.mxu0 0.0
        %1042 = vmatprep.subr.mxu0 0.0
        %1043 = vmatpush1.msra.mxu0 0.0
        %1044 = vmatprep.subr.mxu0 0.0
        %1045 = vmatpush1.msra.mxu0 0.0
        %1046 = vmatprep.mubr.f32.mxu0 0.0
        %1047 = vmatmul.mubr.f32.gmra.mrb[0].mxu0 %v905
        %v1048 = vpop.f32.mrb[0].mxu0
        %v1049 = vadd.f32 %v803, %v1048
        %v1050 = vpop.f32.mrb[0].mxu0
        %1051 = vdwg.mxu0
        %v1052 = vadd.f32 %v1049, 3.0
        %v1053 = vmax.f32 %v1052, 0.0
        %v1054 = vmin.f32 %v1053, 6.0
        %v1055 = vmul.f32 %v1049, %v1054
        %v1056 = vmul.f32 %v1055, 0.16666667
        %1057 = vmatprep.subr.mxu0 0.0
        %1058 = vmatpush1.msra.mxu0 %v796
        %1059 = vmatprep.subr.mxu0 0.0
        %1060 = vmatpush1.msra.mxu0 %v797
        %1061 = vmatprep.subr.mxu0 0.0
        %1062 = vmatpush1.msra.mxu0 0.0
        %1063 = vmatprep.subr.mxu0 0.0
        %1064 = vmatpush1.msra.mxu0 0.0
        %1065 = vmatprep.subr.mxu0 0.0
        %1066 = vmatpush1.msra.mxu0 0.0
        %1067 = vmatprep.subr.mxu0 0.0
        %1068 = vmatpush1.msra.mxu0 0.0
        %1069 = vmatprep.subr.mxu0 0.0
        %1070 = vmatpush1.msra.mxu0 0.0
        %1071 = vmatprep.subr.mxu0 0.0
        %1072 = vmatpush1.msra.mxu0 0.0
        %1073 = vmatprep.subr.mxu0 0.0
        %1074 = vmatpush1.msra.mxu0 0.0
        %1075 = vmatprep.subr.mxu0 0.0
        %1076 = vmatpush1.msra.mxu0 0.0
        %1077 = vmatprep.subr.mxu0 0.0
        %1078 = vmatpush1.msra.mxu0 0.0
        %1079 = vmatprep.subr.mxu0 0.0
        %1080 = vmatpush1.msra.mxu0 0.0
        %1081 = vmatprep.subr.mxu0 0.0
        %1082 = vmatpush1.msra.mxu0 0.0
        %1083 = vmatprep.subr.mxu0 0.0
        %1084 = vmatpush1.msra.mxu0 0.0
        %1085 = vmatprep.subr.mxu0 0.0
        %1086 = vmatpush1.msra.mxu0 0.0
        %1087 = vmatprep.subr.mxu0 0.0
        %1088 = vmatpush1.msra.mxu0 0.0
        %1089 = vmatprep.subr.mxu0 0.0
        %1090 = vmatpush1.msra.mxu0 0.0
        %1091 = vmatprep.subr.mxu0 0.0
        %1092 = vmatpush1.msra.mxu0 0.0
        %1093 = vmatprep.subr.mxu0 0.0
        %1094 = vmatpush1.msra.mxu0 0.0
        %1095 = vmatprep.subr.mxu0 0.0
        %1096 = vmatpush1.msra.mxu0 0.0
        %1097 = vmatprep.subr.mxu0 0.0
        %1098 = vmatpush1.msra.mxu0 0.0
        %1099 = vmatprep.subr.mxu0 0.0
        %1100 = vmatpush1.msra.mxu0 0.0
        %1101 = vmatprep.subr.mxu0 0.0
        %1102 = vmatpush1.msra.mxu0 0.0
        %1103 = vmatprep.subr.mxu0 0.0
        %1104 = vmatpush1.msra.mxu0 0.0
        %1105 = vmatprep.subr.mxu0 0.0
        %1106 = vmatpush1.msra.mxu0 0.0
        %1107 = vmatprep.subr.mxu0 0.0
        %1108 = vmatpush1.msra.mxu0 0.0
        %1109 = vmatprep.subr.mxu0 0.0
        %1110 = vmatpush1.msra.mxu0 0.0
        %1111 = vmatprep.subr.mxu0 0.0
        %1112 = vmatpush1.msra.mxu0 0.0
        %1113 = vmatprep.subr.mxu0 0.0
        %1114 = vmatpush1.msra.mxu0 0.0
        %1115 = vmatprep.subr.mxu0 0.0
        %1116 = vmatpush1.msra.mxu0 0.0
        %1117 = vmatprep.subr.mxu0 0.0
        %1118 = vmatpush1.msra.mxu0 0.0
        %1119 = vmatprep.subr.mxu0 0.0
        %1120 = vmatpush1.msra.mxu0 0.0
        %1121 = vmatprep.mubr.f32.mxu0 0.0
        %1122 = vmatmul.mubr.f32.gmra.mrb[0].mxu0 %v905
        %v1123 = vpop.f32.mrb[0].mxu0
        %v1124 = vadd.f32 %v803, %v1123
        %v1125 = vpop.f32.mrb[0].mxu0
        %1126 = vdwg.mxu0
        %v1127 = vadd.f32 %v1124, 3.0
        %v1128 = vmax.f32 %v1127, 0.0
        %v1129 = vmin.f32 %v1128, 6.0
        %v1130 = vmul.f32 %v1124, %v1129
        %v1131 = vmul.f32 %v1130, 0.16666667
        %v1132 = vld [vmem:[%s5] sm:$0xff]
        %v1133 = vld [vmem:[%s5 + $0x8] sm:$0xff]
        %v1134 = vld [vmem:[%s6] sm:$0xff]
        %v1135 = vld [vmem:[%s6 + $0x8] sm:$0xff]
        %1137 = vset.pattern.permute.xlu0 0
        %1138 = vperm.xlu0 %1137, %v1134
        %v1139 = vpop.permute.xlu0 %1138
        %1142 = vset.pattern.permute.xlu0 0
        %1143 = vperm.xlu0 %1142, %v1135
        %v1144 = vpop.permute.xlu0 %1143
        %vm1146 = vcmask 64512
        %v1148 = vsel %vm1146, %v1132, 0
        %v1151 = vsel %vm1146, %v1133, 0
        %1153 = vmatprep.subr.mxu0 0.0
        %1154 = vmatpush1.msra.mxu0 %v981
        %1155 = vmatprep.subr.mxu0 0.0
        %1156 = vmatpush1.msra.mxu0 0.0
        %1157 = vmatprep.subr.mxu0 0.0
        %1158 = vmatpush1.msra.mxu0 0.0
        %1159 = vmatprep.subr.mxu0 0.0
        %1160 = vmatpush1.msra.mxu0 0.0
        %1161 = vmatprep.subr.mxu0 0.0
        %1162 = vmatpush1.msra.mxu0 0.0
        %1163 = vmatprep.subr.mxu0 0.0
        %1164 = vmatpush1.msra.mxu0 0.0
        %1165 = vmatprep.subr.mxu0 0.0
        %1166 = vmatpush1.msra.mxu0 0.0
        %1167 = vmatprep.subr.mxu0 0.0
        %1168 = vmatpush1.msra.mxu0 0.0
        %1169 = vmatprep.subr.mxu0 0.0
        %1170 = vmatpush1.msra.mxu0 0.0
        %1171 = vmatprep.subr.mxu0 0.0
        %1172 = vmatpush1.msra.mxu0 0.0
        %1173 = vmatprep.subr.mxu0 0.0
        %1174 = vmatpush1.msra.mxu0 0.0
        %1175 = vmatprep.subr.mxu0 0.0
        %1176 = vmatpush1.msra.mxu0 0.0
        %1177 = vmatprep.subr.mxu0 0.0
        %1178 = vmatpush1.msra.mxu0 0.0
        %1179 = vmatprep.subr.mxu0 0.0
        %1180 = vmatpush1.msra.mxu0 0.0
        %1181 = vmatprep.subr.mxu0 0.0
        %1182 = vmatpush1.msra.mxu0 0.0
        %1183 = vmatprep.subr.mxu0 0.0
        %1184 = vmatpush1.msra.mxu0 0.0
        %1185 = vmatprep.subr.mxu0 0.0
        %1186 = vmatpush1.msra.mxu0 0.0
        %1187 = vmatprep.subr.mxu0 0.0
        %1188 = vmatpush1.msra.mxu0 0.0
        %1189 = vmatprep.subr.mxu0 0.0
        %1190 = vmatpush1.msra.mxu0 0.0
        %1191 = vmatprep.subr.mxu0 0.0
        %1192 = vmatpush1.msra.mxu0 0.0
        %1193 = vmatprep.subr.mxu0 0.0
        %1194 = vmatpush1.msra.mxu0 0.0
        %1195 = vmatprep.subr.mxu0 0.0
        %1196 = vmatpush1.msra.mxu0 0.0
        %1197 = vmatprep.subr.mxu0 0.0
        %1198 = vmatpush1.msra.mxu0 0.0
        %1199 = vmatprep.subr.mxu0 0.0
        %1200 = vmatpush1.msra.mxu0 0.0
        %1201 = vmatprep.subr.mxu0 0.0
        %1202 = vmatpush1.msra.mxu0 0.0
        %1203 = vmatprep.subr.mxu0 0.0
        %1204 = vmatpush1.msra.mxu0 0.0
        %1205 = vmatprep.subr.mxu0 0.0
        %1206 = vmatpush1.msra.mxu0 0.0
        %1207 = vmatprep.subr.mxu0 0.0
        %1208 = vmatpush1.msra.mxu0 0.0
        %1209 = vmatprep.subr.mxu0 0.0
        %1210 = vmatpush1.msra.mxu0 0.0
        %1211 = vmatprep.subr.mxu0 0.0
        %1212 = vmatpush1.msra.mxu0 0.0
        %1213 = vmatprep.subr.mxu0 0.0
        %1214 = vmatpush1.msra.mxu0 0.0
        %1215 = vmatprep.subr.mxu0 0.0
        %1216 = vmatpush1.msra.mxu0 0.0
        %1217 = vmatprep.mubr.f32.mxu0 0.0
        %1218 = vmatmul.mubr.f32.gmra.mrb[0].mxu0 %v1148
        %v1219 = vpop.f32.mrb[0].mxu0
        %v1220 = vadd.f32 %v1139, %v1219
        %v1221 = vpop.f32.mrb[0].mxu0
        %1222 = vmatprep.mubr.f32.mxu0 0.0
        %1223 = vmatmul.mubr.f32.gmra.mrb[0].mxu0 %v1151
        %v1224 = vpop.f32.mrb[0].mxu0
        %v1225 = vadd.f32 %v1144, %v1224
        %v1226 = vpop.f32.mrb[0].mxu0
        %1227 = vdwg.mxu0
        %v1228 = vand.u32 2147483647, %v1220
        %v1229 = vand.u32 2147483647, %v1225
        %v1230 = vsub.f32 0.0, %v1228
        %v1231 = vsub.f32 0.0, %v1229
        %v1232 = vmul.f32 %v1230, 1.442695
        %v1233 = vpow.pop %v1232
        %v1234 = vmul.f32 %v1231, 1.442695
        %v1235 = vpow.pop %v1234
        %v1236 = vadd.f32 %v1233, 1.0
        %v1237 = vadd.f32 %v1235, 1.0
        %v1238 = vrcp.pop %v1236
        %v1239 = vmul.f32 1.0, %v1238
        %v1240 = vrcp.pop %v1237
        %v1241 = vmul.f32 1.0, %v1240
        %vm1242 = vcmp.ge.f32.partialorder %v1220, 0.0
        %vm1243 = vcmp.ge.f32.partialorder %v1225, 0.0
        %v1244 = vmul.f32 %v1233, %v1239
        %v1245 = vmul.f32 %v1235, %v1241
        %v1246 = vsel %vm1242, %v1239, %v1244
        %v1247 = vsel %vm1243, %v1241, %v1245
        %v1248 = vld [vmem:[%s7] sm:$0xff]
        %v1249 = vld [vmem:[%s7 + $0x8] sm:$0xff]
        %v1250 = vld [vmem:[%s8] sm:$0xff]
        %v1251 = vld [vmem:[%s8 + $0x8] sm:$0xff]
        %1253 = vset.pattern.permute.xlu0 0
        %1254 = vperm.xlu0 %1253, %v1250
        %v1255 = vpop.permute.xlu0 %1254
        %1258 = vset.pattern.permute.xlu0 0
        %1259 = vperm.xlu0 %1258, %v1251
        %v1260 = vpop.permute.xlu0 %1259
        %v1263 = vsel %vm1146, %v1248, 0
        %v1266 = vsel %vm1146, %v1249, 0
        %1268 = vmatprep.subr.mxu0 0.0
        %1269 = vmatpush1.msra.mxu0 %v1056
        %1270 = vmatprep.subr.mxu0 0.0
        %1271 = vmatpush1.msra.mxu0 0.0
        %1272 = vmatprep.subr.mxu0 0.0
        %1273 = vmatpush1.msra.mxu0 0.0
        %1274 = vmatprep.subr.mxu0 0.0
        %1275 = vmatpush1.msra.mxu0 0.0
        %1276 = vmatprep.subr.mxu0 0.0
        %1277 = vmatpush1.msra.mxu0 0.0
        %1278 = vmatprep.subr.mxu0 0.0
        %1279 = vmatpush1.msra.mxu0 0.0
        %1280 = vmatprep.subr.mxu0 0.0
        %1281 = vmatpush1.msra.mxu0 0.0
        %1282 = vmatprep.subr.mxu0 0.0
        %1283 = vmatpush1.msra.mxu0 0.0
        %1284 = vmatprep.subr.mxu0 0.0
        %1285 = vmatpush1.msra.mxu0 0.0
        %1286 = vmatprep.subr.mxu0 0.0
        %1287 = vmatpush1.msra.mxu0 0.0
        %1288 = vmatprep.subr.mxu0 0.0
        %1289 = vmatpush1.msra.mxu0 0.0
        %1290 = vmatprep.subr.mxu0 0.0
        %1291 = vmatpush1.msra.mxu0 0.0
        %1292 = vmatprep.subr.mxu0 0.0
        %1293 = vmatpush1.msra.mxu0 0.0
        %1294 = vmatprep.subr.mxu0 0.0
        %1295 = vmatpush1.msra.mxu0 0.0
        %1296 = vmatprep.subr.mxu0 0.0
        %1297 = vmatpush1.msra.mxu0 0.0
        %1298 = vmatprep.subr.mxu0 0.0
        %1299 = vmatpush1.msra.mxu0 0.0
        %1300 = vmatprep.subr.mxu0 0.0
        %1301 = vmatpush1.msra.mxu0 0.0
        %1302 = vmatprep.subr.mxu0 0.0
        %1303 = vmatpush1.msra.mxu0 0.0
        %1304 = vmatprep.subr.mxu0 0.0
        %1305 = vmatpush1.msra.mxu0 0.0
        %1306 = vmatprep.subr.mxu0 0.0
        %1307 = vmatpush1.msra.mxu0 0.0
        %1308 = vmatprep.subr.mxu0 0.0
        %1309 = vmatpush1.msra.mxu0 0.0
        %1310 = vmatprep.subr.mxu0 0.0
        %1311 = vmatpush1.msra.mxu0 0.0
        %1312 = vmatprep.subr.mxu0 0.0
        %1313 = vmatpush1.msra.mxu0 0.0
        %1314 = vmatprep.subr.mxu0 0.0
        %1315 = vmatpush1.msra.mxu0 0.0
        %1316 = vmatprep.subr.mxu0 0.0
        %1317 = vmatpush1.msra.mxu0 0.0
        %1318 = vmatprep.subr.mxu0 0.0
        %1319 = vmatpush1.msra.mxu0 0.0
        %1320 = vmatprep.subr.mxu0 0.0
        %1321 = vmatpush1.msra.mxu0 0.0
        %1322 = vmatprep.subr.mxu0 0.0
        %1323 = vmatpush1.msra.mxu0 0.0
        %1324 = vmatprep.subr.mxu0 0.0
        %1325 = vmatpush1.msra.mxu0 0.0
        %1326 = vmatprep.subr.mxu0 0.0
        %1327 = vmatpush1.msra.mxu0 0.0
        %1328 = vmatprep.subr.mxu0 0.0
        %1329 = vmatpush1.msra.mxu0 0.0
        %1330 = vmatprep.subr.mxu0 0.0
        %1331 = vmatpush1.msra.mxu0 0.0
        %1332 = vmatprep.mubr.f32.mxu0 0.0
        %1333 = vmatmul.mubr.f32.gmra.mrb[0].mxu0 %v1263
        %v1334 = vpop.f32.mrb[0].mxu0
        %v1335 = vadd.f32 %v1255, %v1334
        %v1336 = vpop.f32.mrb[0].mxu0
        %1337 = vmatprep.mubr.f32.mxu0 0.0
        %1338 = vmatmul.mubr.f32.gmra.mrb[0].mxu0 %v1266
        %v1339 = vpop.f32.mrb[0].mxu0
        %v1340 = vadd.f32 %v1260, %v1339
        %v1341 = vpop.f32.mrb[0].mxu0
        %1342 = vdwg.mxu0
        %v1343 = vand.u32 2147483647, %v1335
        %v1344 = vand.u32 2147483647, %v1340
        %v1345 = vsub.f32 0.0, %v1343
        %v1346 = vsub.f32 0.0, %v1344
        %v1347 = vmul.f32 %v1345, 1.442695
        %v1348 = vpow.pop %v1347
        %v1349 = vmul.f32 %v1346, 1.442695
        %v1350 = vpow.pop %v1349
        %v1351 = vadd.f32 %v1348, 1.0
        %v1352 = vadd.f32 %v1350, 1.0
        %v1353 = vrcp.pop %v1351
        %v1354 = vmul.f32 1.0, %v1353
        %v1355 = vrcp.pop %v1352
        %v1356 = vmul.f32 1.0, %v1355
        %vm1357 = vcmp.ge.f32.partialorder %v1335, 0.0
        %vm1358 = vcmp.ge.f32.partialorder %v1340, 0.0
        %v1359 = vmul.f32 %v1348, %v1354
        %v1360 = vmul.f32 %v1350, %v1356
        %v1361 = vsel %vm1357, %v1354, %v1359
        %v1362 = vsel %vm1358, %v1356, %v1360
        %v1363 = vld [vmem:[%s9] sm:$0xff]
        %v1364 = vld [vmem:[%s9 + $0x8] sm:$0xff]
        %v1365 = vld [vmem:[%s10] sm:$0xff]
        %v1366 = vld [vmem:[%s10 + $0x8] sm:$0xff]
        %1368 = vset.pattern.permute.xlu0 0
        %1369 = vperm.xlu0 %1368, %v1365
        %v1370 = vpop.permute.xlu0 %1369
        %1373 = vset.pattern.permute.xlu0 0
        %1374 = vperm.xlu0 %1373, %v1366
        %v1375 = vpop.permute.xlu0 %1374
        %v1378 = vsel %vm1146, %v1363, 0
        %v1381 = vsel %vm1146, %v1364, 0
        %1383 = vmatprep.subr.mxu0 0.0
        %1384 = vmatpush1.msra.mxu0 %v1131
        %1385 = vmatprep.subr.mxu0 0.0
        %1386 = vmatpush1.msra.mxu0 0.0
        %1387 = vmatprep.subr.mxu0 0.0
        %1388 = vmatpush1.msra.mxu0 0.0
        %1389 = vmatprep.subr.mxu0 0.0
        %1390 = vmatpush1.msra.mxu0 0.0
        %1391 = vmatprep.subr.mxu0 0.0
        %1392 = vmatpush1.msra.mxu0 0.0
        %1393 = vmatprep.subr.mxu0 0.0
        %1394 = vmatpush1.msra.mxu0 0.0
        %1395 = vmatprep.subr.mxu0 0.0
        %1396 = vmatpush1.msra.mxu0 0.0
        %1397 = vmatprep.subr.mxu0 0.0
        %1398 = vmatpush1.msra.mxu0 0.0
        %1399 = vmatprep.subr.mxu0 0.0
        %1400 = vmatpush1.msra.mxu0 0.0
        %1401 = vmatprep.subr.mxu0 0.0
        %1402 = vmatpush1.msra.mxu0 0.0
        %1403 = vmatprep.subr.mxu0 0.0
        %1404 = vmatpush1.msra.mxu0 0.0
        %1405 = vmatprep.subr.mxu0 0.0
        %1406 = vmatpush1.msra.mxu0 0.0
        %1407 = vmatprep.subr.mxu0 0.0
        %1408 = vmatpush1.msra.mxu0 0.0
        %1409 = vmatprep.subr.mxu0 0.0
        %1410 = vmatpush1.msra.mxu0 0.0
        %1411 = vmatprep.subr.mxu0 0.0
        %1412 = vmatpush1.msra.mxu0 0.0
        %1413 = vmatprep.subr.mxu0 0.0
        %1414 = vmatpush1.msra.mxu0 0.0
        %1415 = vmatprep.subr.mxu0 0.0
        %1416 = vmatpush1.msra.mxu0 0.0
        %1417 = vmatprep.subr.mxu0 0.0
        %1418 = vmatpush1.msra.mxu0 0.0
        %1419 = vmatprep.subr.mxu0 0.0
        %1420 = vmatpush1.msra.mxu0 0.0
        %1421 = vmatprep.subr.mxu0 0.0
        %1422 = vmatpush1.msra.mxu0 0.0
        %1423 = vmatprep.subr.mxu0 0.0
        %1424 = vmatpush1.msra.mxu0 0.0
        %1425 = vmatprep.subr.mxu0 0.0
        %1426 = vmatpush1.msra.mxu0 0.0
        %1427 = vmatprep.subr.mxu0 0.0
        %1428 = vmatpush1.msra.mxu0 0.0
        %1429 = vmatprep.subr.mxu0 0.0
        %1430 = vmatpush1.msra.mxu0 0.0
        %1431 = vmatprep.subr.mxu0 0.0
        %1432 = vmatpush1.msra.mxu0 0.0
        %1433 = vmatprep.subr.mxu0 0.0
        %1434 = vmatpush1.msra.mxu0 0.0
        %1435 = vmatprep.subr.mxu0 0.0
        %1436 = vmatpush1.msra.mxu0 0.0
        %1437 = vmatprep.subr.mxu0 0.0
        %1438 = vmatpush1.msra.mxu0 0.0
        %1439 = vmatprep.subr.mxu0 0.0
        %1440 = vmatpush1.msra.mxu0 0.0
        %1441 = vmatprep.subr.mxu0 0.0
        %1442 = vmatpush1.msra.mxu0 0.0
        %1443 = vmatprep.subr.mxu0 0.0
        %1444 = vmatpush1.msra.mxu0 0.0
        %1445 = vmatprep.subr.mxu0 0.0
        %1446 = vmatpush1.msra.mxu0 0.0
        %1447 = vmatprep.mubr.f32.mxu0 0.0
        %1448 = vmatmul.mubr.f32.gmra.mrb[0].mxu0 %v1378
        %v1449 = vpop.f32.mrb[0].mxu0
        %v1450 = vadd.f32 %v1370, %v1449
        %v1451 = vpop.f32.mrb[0].mxu0
        %1452 = vmatprep.mubr.f32.mxu0 0.0
        %1453 = vmatmul.mubr.f32.gmra.mrb[0].mxu0 %v1381
        %v1454 = vpop.f32.mrb[0].mxu0
        %v1455 = vadd.f32 %v1375, %v1454
        %v1456 = vpop.f32.mrb[0].mxu0
        %1457 = vdwg.mxu0
        %v1458 = vand.u32 2147483647, %v1450
        %v1459 = vand.u32 2147483647, %v1455
        %v1460 = vsub.f32 0.0, %v1458
        %v1461 = vsub.f32 0.0, %v1459
        %v1462 = vmul.f32 %v1460, 1.442695
        %v1463 = vpow.pop %v1462
        %v1464 = vmul.f32 %v1461, 1.442695
        %v1465 = vpow.pop %v1464
        %v1466 = vadd.f32 %v1463, 1.0
        %v1467 = vadd.f32 %v1465, 1.0
        %v1468 = vrcp.pop %v1466
        %v1469 = vmul.f32 1.0, %v1468
        %v1470 = vrcp.pop %v1467
        %v1471 = vmul.f32 1.0, %v1470
        %vm1472 = vcmp.ge.f32.partialorder %v1450, 0.0
        %vm1473 = vcmp.ge.f32.partialorder %v1455, 0.0
        %v1474 = vmul.f32 %v1463, %v1469
        %v1475 = vmul.f32 %v1465, %v1471
        %v1476 = vsel %vm1472, %v1469, %v1474
        %v1477 = vsel %vm1473, %v1471, %v1475
        %v1479 = vsel %vm1146, %v1361, 0
        %v1482 = vsel %vm1146, %v1362, 0
        %1484 = vmatprep.subr.mxu0 0.0
        %1485 = vmatpush1.msra.mxu0 %v602
        %1486 = vmatprep.subr.mxu0 0.0
        %1487 = vmatpush1.msra.mxu0 0.0
        %1488 = vmatprep.subr.mxu0 0.0
        %1489 = vmatpush1.msra.mxu0 0.0
        %1490 = vmatprep.subr.mxu0 0.0
        %1491 = vmatpush1.msra.mxu0 0.0
        %1492 = vmatprep.subr.mxu0 0.0
        %1493 = vmatpush1.msra.mxu0 0.0
        %1494 = vmatprep.subr.mxu0 0.0
        %1495 = vmatpush1.msra.mxu0 0.0
        %1496 = vmatprep.subr.mxu0 0.0
        %1497 = vmatpush1.msra.mxu0 0.0
        %1498 = vmatprep.subr.mxu0 0.0
        %1499 = vmatpush1.msra.mxu0 0.0
        %1500 = vmatprep.subr.mxu0 0.0
        %1501 = vmatpush1.msra.mxu0 0.0
        %1502 = vmatprep.subr.mxu0 0.0
        %1503 = vmatpush1.msra.mxu0 0.0
        %1504 = vmatprep.subr.mxu0 0.0
        %1505 = vmatpush1.msra.mxu0 0.0
        %1506 = vmatprep.subr.mxu0 0.0
        %1507 = vmatpush1.msra.mxu0 0.0
        %1508 = vmatprep.subr.mxu0 0.0
        %1509 = vmatpush1.msra.mxu0 0.0
        %1510 = vmatprep.subr.mxu0 0.0
        %1511 = vmatpush1.msra.mxu0 0.0
        %1512 = vmatprep.subr.mxu0 0.0
        %1513 = vmatpush1.msra.mxu0 0.0
        %1514 = vmatprep.subr.mxu0 0.0
        %1515 = vmatpush1.msra.mxu0 0.0
        %1516 = vmatprep.subr.mxu0 0.0
        %1517 = vmatpush1.msra.mxu0 0.0
        %1518 = vmatprep.subr.mxu0 0.0
        %1519 = vmatpush1.msra.mxu0 0.0
        %1520 = vmatprep.subr.mxu0 0.0
        %1521 = vmatpush1.msra.mxu0 0.0
        %1522 = vmatprep.subr.mxu0 0.0
        %1523 = vmatpush1.msra.mxu0 0.0
        %1524 = vmatprep.subr.mxu0 0.0
        %1525 = vmatpush1.msra.mxu0 0.0
        %1526 = vmatprep.subr.mxu0 0.0
        %1527 = vmatpush1.msra.mxu0 0.0
        %1528 = vmatprep.subr.mxu0 0.0
        %1529 = vmatpush1.msra.mxu0 0.0
        %1530 = vmatprep.subr.mxu0 0.0
        %1531 = vmatpush1.msra.mxu0 0.0
        %1532 = vmatprep.subr.mxu0 0.0
        %1533 = vmatpush1.msra.mxu0 0.0
        %1534 = vmatprep.subr.mxu0 0.0
        %1535 = vmatpush1.msra.mxu0 0.0
        %1536 = vmatprep.subr.mxu0 0.0
        %1537 = vmatpush1.msra.mxu0 0.0
        %1538 = vmatprep.subr.mxu0 0.0
        %1539 = vmatpush1.msra.mxu0 0.0
        %1540 = vmatprep.subr.mxu0 0.0
        %1541 = vmatpush1.msra.mxu0 0.0
        %1542 = vmatprep.subr.mxu0 0.0
        %1543 = vmatpush1.msra.mxu0 0.0
        %1544 = vmatprep.subr.mxu0 0.0
        %1545 = vmatpush1.msra.mxu0 0.0
        %1546 = vmatprep.subr.mxu0 0.0
        %1547 = vmatpush1.msra.mxu0 0.0
        %1548 = vmatprep.mubr.f32.mxu0 0.0
        %1549 = vmatmul.mubr.f32.gmra.mrb[0].mxu0 %v1479
        %v1550 = vpop.f32.mrb[0].mxu0
        %v1551 = vadd.f32 0.0, %v1550
        %v1552 = vpop.f32.mrb[0].mxu0
        %1553 = vmatprep.mubr.f32.mxu0 0.0
        %1554 = vmatmul.mubr.f32.gmra.mrb[0].mxu0 %v1482
        %v1555 = vpop.f32.mrb[0].mxu0
        %v1556 = vadd.f32 0.0, %v1555
        %v1557 = vpop.f32.mrb[0].mxu0
        %1558 = vdwg.mxu0
        %v1560 = vsel %vm903, %v1476, 0
        %v1563 = vsel %vm903, %v1477, 0
        %1565 = vmatprep.subr.mxu0 0.0
        %1566 = vmatpush1.msra.mxu0 %v603
        %1567 = vmatprep.subr.mxu0 0.0
        %1568 = vmatpush1.msra.mxu0 %v604
        %1569 = vmatprep.subr.mxu0 0.0
        %1570 = vmatpush1.msra.mxu0 0.0
        %1571 = vmatprep.subr.mxu0 0.0
        %1572 = vmatpush1.msra.mxu0 0.0
        %1573 = vmatprep.subr.mxu0 0.0
        %1574 = vmatpush1.msra.mxu0 0.0
        %1575 = vmatprep.subr.mxu0 0.0
        %1576 = vmatpush1.msra.mxu0 0.0
        %1577 = vmatprep.subr.mxu0 0.0
        %1578 = vmatpush1.msra.mxu0 0.0
        %1579 = vmatprep.subr.mxu0 0.0
        %1580 = vmatpush1.msra.mxu0 0.0
        %1581 = vmatprep.subr.mxu0 0.0
        %1582 = vmatpush1.msra.mxu0 0.0
        %1583 = vmatprep.subr.mxu0 0.0
        %1584 = vmatpush1.msra.mxu0 0.0
        %1585 = vmatprep.subr.mxu0 0.0
        %1586 = vmatpush1.msra.mxu0 0.0
        %1587 = vmatprep.subr.mxu0 0.0
        %1588 = vmatpush1.msra.mxu0 0.0
        %1589 = vmatprep.subr.mxu0 0.0
        %1590 = vmatpush1.msra.mxu0 0.0
        %1591 = vmatprep.subr.mxu0 0.0
        %1592 = vmatpush1.msra.mxu0 0.0
        %1593 = vmatprep.subr.mxu0 0.0
        %1594 = vmatpush1.msra.mxu0 0.0
        %1595 = vmatprep.subr.mxu0 0.0
        %1596 = vmatpush1.msra.mxu0 0.0
        %1597 = vmatprep.subr.mxu0 0.0
        %1598 = vmatpush1.msra.mxu0 0.0
        %1599 = vmatprep.subr.mxu0 0.0
        %1600 = vmatpush1.msra.mxu0 0.0
        %1601 = vmatprep.subr.mxu0 0.0
        %1602 = vmatpush1.msra.mxu0 0.0
        %1603 = vmatprep.subr.mxu0 0.0
        %1604 = vmatpush1.msra.mxu0 0.0
        %1605 = vmatprep.subr.mxu0 0.0
        %1606 = vmatpush1.msra.mxu0 0.0
        %1607 = vmatprep.subr.mxu0 0.0
        %1608 = vmatpush1.msra.mxu0 0.0
        %1609 = vmatprep.subr.mxu0 0.0
        %1610 = vmatpush1.msra.mxu0 0.0
        %1611 = vmatprep.subr.mxu0 0.0
        %1612 = vmatpush1.msra.mxu0 0.0
        %1613 = vmatprep.subr.mxu0 0.0
        %1614 = vmatpush1.msra.mxu0 0.0
        %1615 = vmatprep.subr.mxu0 0.0
        %1616 = vmatpush1.msra.mxu0 0.0
        %1617 = vmatprep.subr.mxu0 0.0
        %1618 = vmatpush1.msra.mxu0 0.0
        %1619 = vmatprep.subr.mxu0 0.0
        %1620 = vmatpush1.msra.mxu0 0.0
        %1621 = vmatprep.subr.mxu0 0.0
        %1622 = vmatpush1.msra.mxu0 0.0
        %1623 = vmatprep.subr.mxu0 0.0
        %1624 = vmatpush1.msra.mxu0 0.0
        %1625 = vmatprep.subr.mxu0 0.0
        %1626 = vmatpush1.msra.mxu0 0.0
        %1627 = vmatprep.subr.mxu0 0.0
        %1628 = vmatpush1.msra.mxu0 0.0
        %1629 = vmatprep.mubr.f32.mxu0 0.0
        %1630 = vmatmul.mubr.f32.gmra.mrb[0].mxu0 %v1560
        %v1631 = vpop.f32.mrb[0].mxu0
        %v1632 = vadd.f32 0.0, %v1631
        %v1633 = vpop.f32.mrb[0].mxu0
        %1634 = vmatprep.mubr.f32.mxu0 0.0
        %1635 = vmatmul.mubr.f32.gmra.mrb[0].mxu0 %v1563
        %v1636 = vpop.f32.mrb[0].mxu0
        %v1637 = vadd.f32 0.0, %v1636
        %v1638 = vpop.f32.mrb[0].mxu0
        %1639 = vdwg.mxu0
        %v1640 = vmul.f32 %v1551, %v1632
        %v1641 = vmul.f32 %v1556, %v1637
        %v1644 = vcombine.high %v1640, %v1640
        %v1646 = vunpack.c.l.s4 1966171168
        %v1647 = vunpack.c.0.s8 %v1646
        %v1648 = vlaneseq
        %v1649 = vshrl.u32 %v1648, 7
        %v1650 = vsub.s32 %v1647, %v1649
        %v1651 = vrot.slane %v1640, %v1650
        %v1653 = vunpack.c.l.s4 1966171168
        %v1654 = vunpack.c.0.s8 %v1653
        %v1655 = vlaneseq
        %v1656 = vshrl.u32 %v1655, 7
        %v1657 = vsub.s32 %v1654, %v1656
        %v1658 = vrot.slane %v1644, %v1657
        %v1659 = vcombine.high %v1651, %v1651
        %v1660 = vcombine.high %v1658, %v1658
        %v1662 = vunpack.c.l.s4 1966171168
        %v1663 = vunpack.c.0.s8 %v1662
        %v1664 = vlaneseq
        %v1665 = vshrl.u32 %v1664, 7
        %v1666 = vsub.s32 %v1663, %v1665
        %v1667 = vrot.slane %v1651, %v1666
        %v1669 = vunpack.c.l.s4 1966171168
        %v1670 = vunpack.c.0.s8 %v1669
        %v1671 = vlaneseq
        %v1672 = vshrl.u32 %v1671, 7
        %v1673 = vsub.s32 %v1670, %v1672
        %v1674 = vrot.slane %v1658, %v1673
        %v1676 = vunpack.c.l.s4 1966171168
        %v1677 = vunpack.c.0.s8 %v1676
        %v1678 = vlaneseq
        %v1679 = vshrl.u32 %v1678, 7
        %v1680 = vsub.s32 %v1677, %v1679
        %v1681 = vrot.slane %v1659, %v1680
        %v1683 = vunpack.c.l.s4 1966171168
        %v1684 = vunpack.c.0.s8 %v1683
        %v1685 = vlaneseq
        %v1686 = vshrl.u32 %v1685, 7
        %v1687 = vsub.s32 %v1684, %v1686
        %v1688 = vrot.slane %v1660, %v1687
        %v1689 = vcombine.high %v1667, %v1667
        %v1690 = vcombine.high %v1674, %v1674
        %v1691 = vcombine.high %v1681, %v1681
        %v1692 = vcombine.high %v1688, %v1688
        %v1693 = vcombine.high %v1641, %v1641
        %v1695 = vunpack.c.l.s4 1966171168
        %v1696 = vunpack.c.0.s8 %v1695
        %v1697 = vlaneseq
        %v1698 = vshrl.u32 %v1697, 7
        %v1699 = vsub.s32 %v1696, %v1698
        %v1700 = vrot.slane %v1641, %v1699
        %v1702 = vunpack.c.l.s4 1966171168
        %v1703 = vunpack.c.0.s8 %v1702
        %v1704 = vlaneseq
        %v1705 = vshrl.u32 %v1704, 7
        %v1706 = vsub.s32 %v1703, %v1705
        %v1707 = vrot.slane %v1693, %v1706
        %v1708 = vcombine.high %v1700, %v1700
        %v1709 = vcombine.high %v1707, %v1707
        %v1711 = vunpack.c.l.s4 1966171168
        %v1712 = vunpack.c.0.s8 %v1711
        %v1713 = vlaneseq
        %v1714 = vshrl.u32 %v1713, 7
        %v1715 = vsub.s32 %v1712, %v1714
        %v1716 = vrot.slane %v1700, %v1715
        %v1718 = vunpack.c.l.s4 1966171168
        %v1719 = vunpack.c.0.s8 %v1718
        %v1720 = vlaneseq
        %v1721 = vshrl.u32 %v1720, 7
        %v1722 = vsub.s32 %v1719, %v1721
        %v1723 = vrot.slane %v1707, %v1722
        %v1725 = vunpack.c.l.s4 1966171168
        %v1726 = vunpack.c.0.s8 %v1725
        %v1727 = vlaneseq
        %v1728 = vshrl.u32 %v1727, 7
        %v1729 = vsub.s32 %v1726, %v1728
        %v1730 = vrot.slane %v1708, %v1729
        %v1732 = vunpack.c.l.s4 1966171168
        %v1733 = vunpack.c.0.s8 %v1732
        %v1734 = vlaneseq
        %v1735 = vshrl.u32 %v1734, 7
        %v1736 = vsub.s32 %v1733, %v1735
        %v1737 = vrot.slane %v1709, %v1736
        %v1738 = vcombine.high %v1716, %v1716
        %v1739 = vcombine.high %v1723, %v1723
        %v1740 = vcombine.high %v1730, %v1730
        %v1741 = vcombine.high %v1737, %v1737
        %v1742 = vlaneseq
        %v1743 = vshrl.u32 %v1742, 7
        %v1744 = vsub.s32 0, %v1743
        %v1745 = vrot.slane %v1667, %v1744
        %v1746 = vlaneseq
        %v1747 = vshrl.u32 %v1746, 7
        %v1748 = vsub.s32 0, %v1747
        %v1749 = vrot.slane %v1681, %v1748
        %v1750 = vlaneseq
        %v1751 = vshrl.u32 %v1750, 7
        %v1752 = vsub.s32 0, %v1751
        %v1753 = vrot.slane %v1689, %v1752
        %v1754 = vlaneseq
        %v1755 = vshrl.u32 %v1754, 7
        %v1756 = vsub.s32 0, %v1755
        %v1757 = vrot.slane %v1691, %v1756
        %v1758 = vlaneseq
        %v1759 = vshrl.u32 %v1758, 7
        %v1760 = vsub.s32 0, %v1759
        %v1761 = vrot.slane %v1674, %v1760
        %v1762 = vlaneseq
        %v1763 = vshrl.u32 %v1762, 7
        %v1764 = vsub.s32 0, %v1763
        %v1765 = vrot.slane %v1688, %v1764
        %v1766 = vlaneseq
        %v1767 = vshrl.u32 %v1766, 7
        %v1768 = vsub.s32 0, %v1767
        %v1769 = vrot.slane %v1690, %v1768
        %v1770 = vlaneseq
        %v1771 = vshrl.u32 %v1770, 7
        %v1772 = vsub.s32 0, %v1771
        %v1773 = vrot.slane %v1692, %v1772
        %v1774 = vlaneseq
        %v1775 = vshrl.u32 %v1774, 7
        %v1776 = vsub.s32 0, %v1775
        %v1777 = vrot.slane %v1716, %v1776
        %v1778 = vlaneseq
        %v1779 = vshrl.u32 %v1778, 7
        %v1780 = vsub.s32 0, %v1779
        %v1781 = vrot.slane %v1730, %v1780
        %v1782 = vlaneseq
        %v1783 = vshrl.u32 %v1782, 7
        %v1784 = vsub.s32 0, %v1783
        %v1785 = vrot.slane %v1738, %v1784
        %v1786 = vlaneseq
        %v1787 = vshrl.u32 %v1786, 7
        %v1788 = vsub.s32 0, %v1787
        %v1789 = vrot.slane %v1740, %v1788
        %v1790 = vlaneseq
        %v1791 = vshrl.u32 %v1790, 7
        %v1792 = vsub.s32 0, %v1791
        %v1793 = vrot.slane %v1723, %v1792
        %v1794 = vlaneseq
        %v1795 = vshrl.u32 %v1794, 7
        %v1796 = vsub.s32 0, %v1795
        %v1797 = vrot.slane %v1737, %v1796
        %v1798 = vlaneseq
        %v1799 = vshrl.u32 %v1798, 7
        %v1800 = vsub.s32 0, %v1799
        %v1801 = vrot.slane %v1739, %v1800
        %v1802 = vlaneseq
        %v1803 = vshrl.u32 %v1802, 7
        %v1804 = vsub.s32 0, %v1803
        %v1805 = vrot.slane %v1741, %v1804
        %v1822 = vmul.f32 %v425, %v1745
        %v1823 = vmul.f32 %v426, %v1749
        %v1824 = vmul.f32 %v427, %v1753
        %v1825 = vmul.f32 %v428, %v1757
        %v1826 = vmul.f32 %v429, %v1761
        %v1827 = vmul.f32 %v430, %v1765
        %v1828 = vmul.f32 %v431, %v1769
        %v1829 = vmul.f32 %v432, %v1773
        %v1830 = vmul.f32 %v433, %v1777
        %v1831 = vmul.f32 %v434, %v1781
        %v1832 = vmul.f32 %v435, %v1785
        %v1833 = vmul.f32 %v436, %v1789
        %v1834 = vmul.f32 %v437, %v1793
        %v1835 = vmul.f32 %v438, %v1797
        %v1836 = vmul.f32 %v439, %v1801
        %v1837 = vmul.f32 %v440, %v1805
        %v1838 = vlaneseq
        %v1839 = vshrl.u32 %v1838, 7
        %v1840 = vsub.s32 0, %v1839
        %v1841 = vrot.slane %v1246, %v1840
        %1843 = vbcast.lane.b32.xlu0 %v1841, 256
        %v1844 = vpop.permute.xlu0 %1843
        %v1845 = vlaneseq
        %v1846 = vshrl.u32 %v1845, 7
        %v1847 = vsub.s32 1, %v1846
        %v1848 = vrot.slane %v1246, %v1847
        %1850 = vbcast.lane.b32.xlu0 %v1848, 256
        %v1851 = vpop.permute.xlu0 %1850
        %v1852 = vlaneseq
        %v1853 = vshrl.u32 %v1852, 7
        %v1854 = vsub.s32 2, %v1853
        %v1855 = vrot.slane %v1246, %v1854
        %1857 = vbcast.lane.b32.xlu0 %v1855, 256
        %v1858 = vpop.permute.xlu0 %1857
        %v1859 = vlaneseq
        %v1860 = vshrl.u32 %v1859, 7
        %v1861 = vsub.s32 3, %v1860
        %v1862 = vrot.slane %v1246, %v1861
        %1864 = vbcast.lane.b32.xlu0 %v1862, 256
        %v1865 = vpop.permute.xlu0 %1864
        %v1866 = vlaneseq
        %v1867 = vshrl.u32 %v1866, 7
        %v1868 = vsub.s32 4, %v1867
        %v1869 = vrot.slane %v1246, %v1868
        %1871 = vbcast.lane.b32.xlu0 %v1869, 256
        %v1872 = vpop.permute.xlu0 %1871
        %v1873 = vlaneseq
        %v1874 = vshrl.u32 %v1873, 7
        %v1875 = vsub.s32 5, %v1874
        %v1876 = vrot.slane %v1246, %v1875
        %1878 = vbcast.lane.b32.xlu0 %v1876, 256
        %v1879 = vpop.permute.xlu0 %1878
        %v1880 = vlaneseq
        %v1881 = vshrl.u32 %v1880, 7
        %v1882 = vsub.s32 6, %v1881
        %v1883 = vrot.slane %v1246, %v1882
        %1885 = vbcast.lane.b32.xlu0 %v1883, 256
        %v1886 = vpop.permute.xlu0 %1885
        %v1887 = vlaneseq
        %v1888 = vshrl.u32 %v1887, 7
        %v1889 = vsub.s32 7, %v1888
        %v1890 = vrot.slane %v1246, %v1889
        %1892 = vbcast.lane.b32.xlu0 %v1890, 256
        %v1893 = vpop.permute.xlu0 %1892
        %v1894 = vlaneseq
        %v1895 = vshrl.u32 %v1894, 7
        %v1896 = vsub.s32 0, %v1895
        %v1897 = vrot.slane %v1247, %v1896
        %1899 = vbcast.lane.b32.xlu0 %v1897, 256
        %v1900 = vpop.permute.xlu0 %1899
        %v1901 = vlaneseq
        %v1902 = vshrl.u32 %v1901, 7
        %v1903 = vsub.s32 1, %v1902
        %v1904 = vrot.slane %v1247, %v1903
        %1906 = vbcast.lane.b32.xlu0 %v1904, 256
        %v1907 = vpop.permute.xlu0 %1906
        %v1908 = vlaneseq
        %v1909 = vshrl.u32 %v1908, 7
        %v1910 = vsub.s32 2, %v1909
        %v1911 = vrot.slane %v1247, %v1910
        %1913 = vbcast.lane.b32.xlu0 %v1911, 256
        %v1914 = vpop.permute.xlu0 %1913
        %v1915 = vlaneseq
        %v1916 = vshrl.u32 %v1915, 7
        %v1917 = vsub.s32 3, %v1916
        %v1918 = vrot.slane %v1247, %v1917
        %1920 = vbcast.lane.b32.xlu0 %v1918, 256
        %v1921 = vpop.permute.xlu0 %1920
        %v1922 = vlaneseq
        %v1923 = vshrl.u32 %v1922, 7
        %v1924 = vsub.s32 4, %v1923
        %v1925 = vrot.slane %v1247, %v1924
        %1927 = vbcast.lane.b32.xlu0 %v1925, 256
        %v1928 = vpop.permute.xlu0 %1927
        %v1929 = vlaneseq
        %v1930 = vshrl.u32 %v1929, 7
        %v1931 = vsub.s32 5, %v1930
        %v1932 = vrot.slane %v1247, %v1931
        %1934 = vbcast.lane.b32.xlu0 %v1932, 256
        %v1935 = vpop.permute.xlu0 %1934
        %v1936 = vlaneseq
        %v1937 = vshrl.u32 %v1936, 7
        %v1938 = vsub.s32 6, %v1937
        %v1939 = vrot.slane %v1247, %v1938
        %1941 = vbcast.lane.b32.xlu0 %v1939, 256
        %v1942 = vpop.permute.xlu0 %1941
        %v1943 = vlaneseq
        %v1944 = vshrl.u32 %v1943, 7
        %v1945 = vsub.s32 7, %v1944
        %v1946 = vrot.slane %v1247, %v1945
        %1948 = vbcast.lane.b32.xlu0 %v1946, 256
        %v1949 = vpop.permute.xlu0 %1948
        %v1950 = vmul.f32 %v1822, %v1844
        %v1951 = vmul.f32 %v1823, %v1851
        %v1952 = vmul.f32 %v1824, %v1858
        %v1953 = vmul.f32 %v1825, %v1865
        %v1954 = vmul.f32 %v1826, %v1872
        %v1955 = vmul.f32 %v1827, %v1879
        %v1956 = vmul.f32 %v1828, %v1886
        %v1957 = vmul.f32 %v1829, %v1893
        %v1958 = vmul.f32 %v1830, %v1900
        %v1959 = vmul.f32 %v1831, %v1907
        %v1960 = vmul.f32 %v1832, %v1914
        %v1961 = vmul.f32 %v1833, %v1921
        %v1962 = vmul.f32 %v1834, %v1928
        %v1963 = vmul.f32 %v1835, %v1935
        %v1964 = vmul.f32 %v1836, %v1942
        %v1965 = vmul.f32 %v1837, %v1949
        %1966 = vst [vmem:[%s419] sm:$0xf] %v1950
        %1967 = vst [vmem:[%s419 + $0x4] sm:$0xf] %v1951
        %1968 = vst [vmem:[%s419 + $0x8] sm:$0xf] %v1952
        %1969 = vst [vmem:[%s419 + $0xc] sm:$0xf] %v1953
        %1970 = vst [vmem:[%s419 + $0x10] sm:$0xf] %v1954
        %1971 = vst [vmem:[%s419 + $0x14] sm:$0xf] %v1955
        %1972 = vst [vmem:[%s419 + $0x18] sm:$0xf] %v1956
        %1973 = vst [vmem:[%s419 + $0x1c] sm:$0xf] %v1957
        %1974 = vst [vmem:[%s419 + $0x20] sm:$0xf] %v1958
        %1975 = vst [vmem:[%s419 + $0x24] sm:$0xf] %v1959
        %1976 = vst [vmem:[%s419 + $0x28] sm:$0xf] %v1960
        %1977 = vst [vmem:[%s419 + $0x2c] sm:$0xf] %v1961
        %1978 = vst [vmem:[%s419 + $0x30] sm:$0xf] %v1962
        %1979 = vst [vmem:[%s419 + $0x34] sm:$0xf] %v1963
        %1980 = vst [vmem:[%s419 + $0x38] sm:$0xf] %v1964
        %1981 = vst [vmem:[%s419 + $0x3c] sm:$0xf] %v1965
        %s1982 = sand.u32 %s271, 1
        %s1983 = scalar_lea.sflag [#allocation4], %s1982
        %s1984 = sand.u32 %s271, 1
        %s1985 = smul.addr %s1984, 64
        %s1986 = scalar_lea.vmem [#allocation8], %s1985
        // Predicated region
        $region77: #{tpu_custom_call.1} parent=63 // pred_check
          %p1987 = pneg %p281
        $region78: #{tpu_custom_call.1} parent=63 // pred_check_branch
          %1989 = sbr.rel (%p1987) target = $region80
        $region79: #{tpu_custom_call.1} parent=63 // pred_region
          %s1991 = ssub.s32 1024, 1024
          %1992 = vsyncadd %s1983, %s1991
          %s1993 = smul.addr %s27, 16
          %s1994 = smul.addr %s1993, 64
          %s1995 = scalar_lea.hbm %s11, %s1994
          %s1996 = sshll.u32 %s1986, 4
          %s1997 = int_to_ptr.vmem [resolvable:$true] %s1996
          %2002 = dma.vmem_to_hbm [thread:$0]  %s1997, 1024, %s1995, %s1983, 64, 64, 4
        $region80: #{tpu_custom_call.1} parent=63 // pred_fallthru
          _
      $region64: #{tpu_custom_call.1} parent=5 // pred_fallthru
        _
      %p2003 = scmp.le.s32.totalorder 2, %s22
      // Predicated region
      $region81: #{tpu_custom_call.1} parent=5 // pred_check
        %p2004 = pneg %p2003
      $region82: #{tpu_custom_call.1} parent=5 // pred_check_branch
        %2006 = sbr.rel (%p2004) target = $region84
      $region83: #{tpu_custom_call.1} parent=5 // pred_region
        %s2007 = ssub.s32 %s22, 2
        // Predicated region
        $region85: #{tpu_custom_call.1} parent=83 // pred_check
          %p2008 = pneg %p287
        $region86: #{tpu_custom_call.1} parent=83 // pred_check_branch
          %2010 = sbr.rel (%p2008) target = $region88
        $region87: #{tpu_custom_call.1} parent=83 // pred_region
          %s2011 = sand.u32 %s272, 1
          %s2012 = scalar_lea.sflag [#allocation4], %s2011
          %s2013 = sand.u32 %s272, 1
          %s2014 = smul.addr %s2013, 64
          %s2015 = scalar_lea.vmem [#allocation8], %s2014
          %2016 = dma.done %s2012, 1024
        $region88: #{tpu_custom_call.1} parent=83 // pred_fallthru
          _
      $region84: #{tpu_custom_call.1} parent=5 // pred_fallthru
        _
    $region6: #{tpu_custom_call.1} parent=1 // loop_footer
      %s26 = sadd.s32 1, %s22
    $region7: #{tpu_custom_call.1} parent=1 // loop_footer_branch
      %21 = sbr.rel target = $region3
    $region8: #{tpu_custom_call.1} parent=1 // loop_exit
      _
    %2017 = vsyncpa [#allocation3], 1
    %s2018 = scalar_lea.sflag [#allocation3], 1
    %2019 = vsyncpa %s2018, 1
    %2020 = vsyncpa [#allocation6], 1
    %2021 = vsyncpa [#allocation4], 1
    %s2022 = scalar_lea.sflag [#allocation4], 1
    %2023 = vsyncpa %s2022, 1

</llo_original>
